<compile_context>
chip_gen: v7x
topology: tpu7x:2x2x1
jax: 0.10.0
libtpu: 0.0.40
codegen_flags: <defaults>
</compile_context>

<pallas_src>
import math
import functools

import numpy as np
import jax
import jax.numpy as jnp
from jax.experimental import pallas as pl
from jax.experimental.pallas import tpu as pltpu


# ---------------------------------------------------------------------------
# Tiled matmul kernel (bf16 inputs, f32 accumulation)
# ---------------------------------------------------------------------------

def _matmul_kernel(x_ref, w_ref, o_ref, acc_ref):
    @pl.when(pl.program_id(2) == 0)
    def _():
        acc_ref[...] = jnp.zeros_like(acc_ref)

    acc_ref[...] += jnp.dot(
        x_ref[...], w_ref[...], preferred_element_type=jnp.float32)

    @pl.when(pl.program_id(2) == pl.num_programs(2) - 1)
    def _():
        o_ref[...] = acc_ref[...].astype(o_ref.dtype)


def pallas_linear(x, w, *, out_dtype, tm=256, tn=256, tk=512):
    """x: (T, K), w: (K, N) (torch weight pre-transposed) -> (T, N)."""
    T, K = x.shape
    K2, N = w.shape
    assert K == K2
    tm, tn, tk = min(tm, T), min(tn, N), min(tk, K)
    assert T % tm == 0 and N % tn == 0 and K % tk == 0
    grid = (T // tm, N // tn, K // tk)
    return pl.pallas_call(
        _matmul_kernel,
        out_shape=jax.ShapeDtypeStruct((T, N), out_dtype),
        grid_spec=pltpu.PrefetchScalarGridSpec(
            num_scalar_prefetch=0,
            grid=grid,
            in_specs=[
                pl.BlockSpec((tm, tk), lambda i, j, k: (i, k)),
                pl.BlockSpec((tk, tn), lambda i, j, k: (k, j)),
            ],
            out_specs=pl.BlockSpec((tm, tn), lambda i, j, k: (i, j)),
            scratch_shapes=[pltpu.VMEM((tm, tn), jnp.float32)],
        ),
        compiler_params=pltpu.CompilerParams(
            dimension_semantics=("parallel", "parallel", "arbitrary")),
    )(x, w)


# ---------------------------------------------------------------------------
# One-shot split + RoPE pre-pass (hoisted out of the attention inner loop).
# Reads the fused qkv projection once, applies rotary to q (with softmax scale
# folded in) and k, passes v through.  Half-width cos/sin tables.
# ---------------------------------------------------------------------------

def _split_rope_kernel(cos_ref, sin_ref, qkv_ref, q_ref, k_ref, v_ref, *,
                       nh, nkv, hd, scale):
    hd2 = hd // 2
    ch = cos_ref[...]                              # (tm, hd/2) f32
    sh = sin_ref[...]                              # (tm, hd/2) f32

    def rope(x, s):
        # apply_rotary_pos_emb with cos = [c, c], sin = [s, s]:
        #   out[:, :hd/2] = x1*c - x2*s ;  out[:, hd/2:] = x2*c + x1*s
        xf = x.astype(jnp.float32)
        x1 = xf[:, :hd2]
        x2 = xf[:, hd2:]
        o1 = (x1 * ch - x2 * sh) * s
        o2 = (x2 * ch + x1 * sh) * s
        return jnp.concatenate([o1, o2], axis=1).astype(jnp.bfloat16)

    for h in range(nh):                            # query heads: RoPE + softmax scale
        q_ref[:, h * hd:(h + 1) * hd] = rope(qkv_ref[:, h * hd:(h + 1) * hd], scale)
    ko = nh * hd
    for h in range(nkv):                           # key heads: RoPE
        k_ref[:, h * hd:(h + 1) * hd] = rope(
            qkv_ref[:, ko + h * hd: ko + (h + 1) * hd], 1.0)
    vo = (nh + nkv) * hd
    v_ref[...] = qkv_ref[:, vo: vo + nkv * hd].astype(jnp.bfloat16)


def pallas_split_rope(qkv, cos_h, sin_h, *, num_heads, num_kv_heads, head_dim,
                      scale, tm=256):
    T = qkv.shape[0]
    nh, nkv, hd = num_heads, num_kv_heads, head_dim
    tm = min(tm, T)
    assert T % tm == 0
    kernel = functools.partial(_split_rope_kernel, nh=nh, nkv=nkv, hd=hd, scale=scale)
    return pl.pallas_call(
        kernel,
        out_shape=(jax.ShapeDtypeStruct((T, nh * hd), jnp.bfloat16),
                   jax.ShapeDtypeStruct((T, nkv * hd), jnp.bfloat16),
                   jax.ShapeDtypeStruct((T, nkv * hd), jnp.bfloat16)),
        grid_spec=pltpu.PrefetchScalarGridSpec(
            num_scalar_prefetch=0,
            grid=(T // tm,),
            in_specs=[
                pl.BlockSpec((tm, hd // 2), lambda i: (i, 0)),              # cos (half)
                pl.BlockSpec((tm, hd // 2), lambda i: (i, 0)),              # sin (half)
                pl.BlockSpec((tm, (nh + 2 * nkv) * hd), lambda i: (i, 0)),  # fused qkv
            ],
            out_specs=[
                pl.BlockSpec((tm, nh * hd), lambda i: (i, 0)),
                pl.BlockSpec((tm, nkv * hd), lambda i: (i, 0)),
                pl.BlockSpec((tm, nkv * hd), lambda i: (i, 0)),
            ],
        ),
        compiler_params=pltpu.CompilerParams(dimension_semantics=("parallel",)),
    )(cos_h, sin_h, qkv)


# ---------------------------------------------------------------------------
# Flash-style varlen causal attention kernel
#   grid = (kv_head, q_tile, kv_tile); GQA group shared in-kernel;
#   scalar-prefetched per-q-tile kv ranges skip fully-masked tiles.
# ---------------------------------------------------------------------------

def _flash_attn_kernel(kvlo_ref, kvhi_ref,            # scalar prefetch (SMEM)
                       docq_ref, dock_ref, q_ref, k_ref, v_ref, o_ref,
                       m_sc, l_sc, acc_sc, *, groups, tq, tkv, hd):
    qi = pl.program_id(1)
    ki = pl.program_id(2)

    @pl.when(ki == 0)
    def _():
        m_sc[...] = jnp.full_like(m_sc, -1e30)
        l_sc[...] = jnp.zeros_like(l_sc)
        acc_sc[...] = jnp.zeros_like(acc_sc)

    # Skip kv tiles entirely outside this q tile's [doc-start, causal] span.
    @pl.when((ki >= kvlo_ref[qi]) & (ki <= kvhi_ref[qi]))
    def _():
        k = k_ref[...]                                   # (tkv, hd) bf16, RoPE applied
        v = v_ref[...]                                   # (tkv, hd) bf16
        row = qi * tq + jax.lax.broadcasted_iota(jnp.int32, (tq, tkv), 0)
        col = ki * tkv + jax.lax.broadcasted_iota(jnp.int32, (tq, tkv), 1)
        mask = (docq_ref[...] == dock_ref[...]) & (row >= col)

        for g in range(groups):                          # share K/V across GQA group
            q = q_ref[:, g * hd:(g + 1) * hd]            # (tq, hd) bf16, pre-scaled
            s = jax.lax.dot_general(
                q, k, (((1,), (1,)), ((), ())),
                preferred_element_type=jnp.float32)      # (tq, tkv)
            s = jnp.where(mask, s, -1e30)

            m_prev = m_sc[g]
            m_new = jnp.maximum(m_prev, jnp.max(s, axis=-1, keepdims=True))
            alpha = jnp.exp(m_prev - m_new)
            # second where keeps fully-masked rows (doc-boundary tiles) at p == 0
            p = jnp.where(mask, jnp.exp(s - m_new), 0.0)
            l_sc[g] = alpha * l_sc[g] + jnp.sum(p, axis=-1, keepdims=True)
            acc_sc[g] = alpha * acc_sc[g] + jnp.dot(
                p.astype(jnp.bfloat16), v, preferred_element_type=jnp.float32)
            m_sc[g] = m_new

    @pl.when(ki == pl.num_programs(2) - 1)
    def _():
        for g in range(groups):
            # exact f32 normalize in the (once-per-q-tile) epilogue
            o_ref[:, g * hd:(g + 1) * hd] = (acc_sc[g] / l_sc[g]).astype(o_ref.dtype)


def pallas_flash_attention(q, k, v, doc_row, doc_col, kv_lo, kv_hi, *,
                           num_heads, num_kv_heads, head_dim, tq=128, tkv=256):
    """q: (T, nh*hd) (RoPE'd, pre-scaled), k/v: (T, nkv*hd) bf16 ->  (T, nh*hd) bf16."""
    T = q.shape[0]
    groups = num_heads // num_kv_heads
    hd = head_dim
    tq, tkv = min(tq, T), min(tkv, T)
    # TODO(synk): general T not divisible by the tile sizes needs token-axis padding
    # (pad tokens in their own "document" so they never attend to real tokens).
    assert T % tq == 0 and T % tkv == 0
    grid = (num_kv_heads, T // tq, T // tkv)

    def clamp_ki(ki, qi, lo, hi):
        # clamp to the valid kv range so skipped tiles reuse the previous DMA
        return jnp.minimum(jnp.maximum(ki, lo[qi]), hi[qi])

    kernel = functools.partial(_flash_attn_kernel, groups=groups, tq=tq, tkv=tkv, hd=hd)
    return pl.pallas_call(
        kernel,
        out_shape=jax.ShapeDtypeStruct((T, num_heads * hd), jnp.bfloat16),
        grid_spec=pltpu.PrefetchScalarGridSpec(
            num_scalar_prefetch=2,
            grid=grid,
            in_specs=[
                pl.BlockSpec((tq, 1),
                             lambda h, qi, ki, lo, hi: (qi, 0)),                   # doc ids (q)
                pl.BlockSpec((1, tkv),
                             lambda h, qi, ki, lo, hi: (0, clamp_ki(ki, qi, lo, hi))),  # doc ids (k)
                pl.BlockSpec((tq, groups * hd),
                             lambda h, qi, ki, lo, hi: (qi, h)),                   # q (whole GQA group)
                pl.BlockSpec((tkv, hd),
                             lambda h, qi, ki, lo, hi: (clamp_ki(ki, qi, lo, hi), h)),  # k
                pl.BlockSpec((tkv, hd),
                             lambda h, qi, ki, lo, hi: (clamp_ki(ki, qi, lo, hi), h)),  # v
            ],
            out_specs=pl.BlockSpec((tq, groups * hd),
                                   lambda h, qi, ki, lo, hi: (qi, h)),
            scratch_shapes=[
                pltpu.VMEM((groups, tq, 1), jnp.float32),   # m (running max)
                pltpu.VMEM((groups, tq, 1), jnp.float32),   # l (running denom)
                pltpu.VMEM((groups, tq, hd), jnp.float32),  # acc
            ],
        ),
        compiler_params=pltpu.CompilerParams(
            dimension_semantics=("parallel", "parallel", "arbitrary")),
    )(kv_lo, kv_hi, doc_row, doc_col, q, k, v)


# ---------------------------------------------------------------------------
# Glue (JAX): rotary tables, doc ids / kv tile bounds from cu_seqlens, forward
# ---------------------------------------------------------------------------

def rope_cos_sin(position_ids, head_dim, base):
    """Half-width rotary tables (hd/2); full tables are [c, c] / [s, s]."""
    inv_freq = 1.0 / (base ** (np.arange(0, head_dim, 2, dtype=np.float32) / head_dim))
    pos = jnp.asarray(position_ids).astype(jnp.float32)                 # (bsz, seq)
    freqs = pos[..., None] * jnp.asarray(inv_freq)[None, None, :]       # (bsz, seq, hd/2)
    return jnp.cos(freqs), jnp.sin(freqs)


def doc_ids_from_cu_seqlens(cu_seqlens, T):
    t = jnp.arange(T, dtype=jnp.int32)
    cs = jnp.asarray(cu_seqlens).astype(jnp.int32)
    return (jnp.searchsorted(cs, t, side="right") - 1).astype(jnp.int32)


def kv_tile_bounds(cu_seqlens, T, tq, tkv):
    """Per-q-tile [kv_lo, kv_hi] kv-block ranges (doc start of first row, causal
    bound of last row) for masked-tile skipping."""
    doc = doc_ids_from_cu_seqlens(cu_seqlens, T)                        # (T,)
    cs = jnp.asarray(cu_seqlens).astype(jnp.int32)
    doc_start = cs[doc]                                                 # (T,)
    q_first = jnp.arange(T // tq, dtype=jnp.int32) * tq
    q_last = q_first + (tq - 1)
    kv_lo = (doc_start[q_first] // tkv).astype(jnp.int32)
    kv_hi = (q_last // tkv).astype(jnp.int32)
    return doc, kv_lo, kv_hi


def prepare_params(raw):
    """One-time weight prep: fuse q|k|v along N and pre-cast everything to bf16."""
    bf = jnp.bfloat16
    return {
        "w_qkv": jnp.concatenate(
            [raw["wq_t"], raw["wk_t"], raw["wv_t"]], axis=1).astype(bf),
        "w_o": raw["wo_t"].astype(bf),
    }


def gemma_flash_attention2(params, hidden_states, cu_seqlens, max_seqlen_in_batch,
                           position_ids, cfg):
    """Forward of GemmaFlashAttention2: fused qkv proj -> split+RoPE -> varlen causal
    flash attention over cu_seqlens documents -> o proj.  (Eval path: dropout = 0.)"""
    del max_seqlen_in_batch  # masking is derived directly from cu_seqlens
    bsz, q_len, hidden = hidden_states.shape
    nh, nkv, hd = cfg["num_heads"], cfg["num_kv_heads"], cfg["head_dim"]
    T = bsz * q_len
    scale = 1.0 / math.sqrt(hd)
    bf = jnp.bfloat16
    tq = min(cfg.get("tq", 128), T)
    tkv = min(cfg.get("tkv", 256), T)

    x = hidden_states.reshape(T, hidden).astype(bf)

    # fused q|k|v projection: activations are read from HBM once
    qkv = pallas_linear(x, params["w_qkv"], out_dtype=bf)               # (T, (nh+2nkv)*hd)

    cos_h, sin_h = rope_cos_sin(position_ids, hd, cfg["rope_theta"])    # f32, half width
    cos_h = cos_h.reshape(T, hd // 2)
    sin_h = sin_h.reshape(T, hd // 2)

    # one-shot split + RoPE (+ softmax scale folded into q)
    q, k, v = pallas_split_rope(qkv, cos_h, sin_h, num_heads=nh, num_kv_heads=nkv,
                                head_dim=hd, scale=scale)

    doc, kv_lo, kv_hi = kv_tile_bounds(cu_seqlens, T, tq, tkv)
    doc_row = doc.reshape(T, 1)
    doc_col = doc.reshape(1, T)

    attn = pallas_flash_attention(
        q, k, v, doc_row, doc_col, kv_lo, kv_hi,
        num_heads=nh, num_kv_heads=nkv, head_dim=hd, tq=tq, tkv=tkv)    # (T, nh*hd) bf16

    out = pallas_linear(attn, params["w_o"], out_dtype=jnp.float32)
    return out.reshape(bsz, q_len, hidden)


# ---------------------------------------------------------------------------
# Pure-JAX reference (mirrors the kernel's bf16 cast points; scale folded into q,
# which is mathematically identical to scaling the scores)
# ---------------------------------------------------------------------------

def rotate_half(x):
    x1 = x[..., : x.shape[-1] // 2]
    x2 = x[..., x.shape[-1] // 2:]
    return jnp.concatenate([-x2, x1], axis=-1)


def reference_forward(raw_params, hidden_states, cu_seqlens, position_ids, cfg):
    bsz, q_len, hidden = hidden_states.shape
    nh, nkv, hd = cfg["num_heads"], cfg["num_kv_heads"], cfg["head_dim"]
    groups = nh // nkv
    T = bsz * q_len
    scale = 1.0 / math.sqrt(hd)
    bf = jnp.bfloat16

    def linear(a, w, out_dtype):
        return jnp.dot(a.astype(bf), w.astype(bf),
                       preferred_element_type=jnp.float32).astype(out_dtype)

    x = hidden_states.reshape(T, hidden)
    q = linear(x, raw_params["wq_t"], bf).astype(jnp.float32).reshape(T, nh, hd)
    k = linear(x, raw_params["wk_t"], bf).astype(jnp.float32).reshape(T, nkv, hd)
    v = linear(x, raw_params["wv_t"], bf).reshape(T, nkv, hd)

    cos_h, sin_h = rope_cos_sin(position_ids, hd, cfg["rope_theta"])
    cos = jnp.concatenate([cos_h, cos_h], axis=-1).reshape(T, 1, hd)
    sin = jnp.concatenate([sin_h, sin_h], axis=-1).reshape(T, 1, hd)
    q = ((q * cos + rotate_half(q) * sin) * scale).astype(bf)
    k = (k * cos + rotate_half(k) * sin).astype(bf)

    # GQA expansion (reference only; the Pallas kernel shares kv tiles in-kernel)
    k = jnp.repeat(k, groups, axis=1)                                   # (T, nh, hd)
    v = jnp.repeat(v, groups, axis=1)

    doc = doc_ids_from_cu_seqlens(cu_seqlens, T)
    idx = jnp.arange(T)
    mask = (doc[:, None] == doc[None, :]) & (idx[:, None] >= idx[None, :])

    s = jnp.einsum("qhd,khd->hqk", q, k, preferred_element_type=jnp.float32)
    s = jnp.where(mask[None], s, -1e30)
    p = jax.nn.softmax(s, axis=-1)
    attn = jnp.einsum("hqk,khd->qhd", p.astype(bf), v,
                      preferred_element_type=jnp.float32)               # (T, nh, hd)
    attn = attn.reshape(T, nh * hd).astype(bf)
    out = linear(attn, raw_params["wo_t"], jnp.float32)
    return out.reshape(bsz, q_len, hidden)


# ---------------------------------------------------------------------------
# Parameter init (deterministic, synthetic; torch Linear weights pre-transposed)
# ---------------------------------------------------------------------------

def init_params(key, cfg):
    H = cfg["hidden_size"]
    nh, nkv, hd = cfg["num_heads"], cfg["num_kv_heads"], cfg["head_dim"]
    ks = jax.random.split(key, 4)

    def w(k, in_dim, out_dim):
        std = 1.0 / math.sqrt(in_dim)
        return jax.random.normal(k, (in_dim, out_dim), jnp.float32) * std

    return {
        "wq_t": w(ks[0], H, nh * hd),
        "wk_t": w(ks[1], H, nkv * hd),
        "wv_t": w(ks[2], H, nkv * hd),
        "wo_t": w(ks[3], nh * hd, H),
    }


# ---------------------------------------------------------------------------
# Main
# ---------------------------------------------------------------------------

if __name__ == "__main__":
    cfg = dict(
        hidden_size=256,
        num_heads=4,
        num_kv_heads=2,      # GQA factor 2, shared K/V tiles in-kernel (no repeat)
        head_dim=128,        # lane-dense attention blocks / output slabs
        rope_theta=10000.0,
        tq=128,
        tkv=128,             # 2 kv tiles at T=256 -> exercises the tile-skip path
    )
    bsz, seq = 1, 256
    # three packed documents of lengths 80 / 96 / 80
    seg_lens = [80, 96, 80]
    cu_seqlens = np.concatenate([[0], np.cumsum(seg_lens)]).astype(np.int32)
    max_seqlen_in_batch = int(max(seg_lens))
    position_ids = jnp.asarray(
        np.concatenate([np.arange(l) for l in seg_lens])[None, :].astype(np.int32))

    key = jax.random.PRNGKey(0)
    kp, kx = jax.random.split(key)
    raw_params = init_params(kp, cfg)
    params = prepare_params(raw_params)   # bf16 pre-cast + q|k|v weight fusion (one-time)
    hidden_states = jax.random.normal(kx, (bsz, seq, cfg["hidden_size"]), jnp.float32)

    out = gemma_flash_attention2(params, hidden_states, cu_seqlens,
                                 max_seqlen_in_batch, position_ids, cfg)
    out = jax.block_until_ready(out)

    ref = reference_forward(raw_params, hidden_states, cu_seqlens, position_ids, cfg)
    ref = jax.block_until_ready(ref)
    np.testing.assert_allclose(np.asarray(out), np.asarray(ref), atol=3e-2, rtol=3e-2)

    print("KERNEL_OK")
</pallas_src>

<mosaic_0001>
module attributes {stable_mosaic.version = 11 : i64} {
  func.func @_matmul_kernel(%arg0: i32, %arg1: i32, %arg2: i32, %arg3: memref<256x256xbf16, #tpu.memory_space<vmem>>, %arg4: memref<256x256xbf16, #tpu.memory_space<vmem>>, %arg5: memref<256x256xbf16, #tpu.memory_space<vmem>>, %arg6: memref<256x256xf32, #tpu.memory_space<vmem>>) attributes {dimension_semantics = [#tpu.dimension_semantics<parallel>, #tpu.dimension_semantics<parallel>, #tpu.dimension_semantics<arbitrary>], iteration_bounds = array<i64: 1, 4, 1>, scalar_prefetch = 0 : i64, scratch_operands = 1 : i64, tpu.core_type = #tpu.core_type<tc>, window_params = [{transform_indices = @transform_0, window_bounds = array<i64: 256, 256>}, {transform_indices = @transform_1, window_bounds = array<i64: 256, 256>}, {transform_indices = @transform_2, window_bounds = array<i64: 256, 256>}]} {
    %c0_i32 = arith.constant 0 : i32
    %0 = arith.cmpi eq, %arg2, %c0_i32 : i32
    %1 = arith.extui %0 : i1 to i32
    %c0_i32_0 = arith.constant 0 : i32
    %2 = arith.cmpi ne, %1, %c0_i32_0 : i32
    scf.if %2 {
      %cst_10 = arith.constant 0.000000e+00 : f32
      %12 = vector.broadcast %cst_10 : f32 to vector<256x256xf32>
      %c0_11 = arith.constant 0 : index
      %c0_12 = arith.constant 0 : index
      %13 = vector.load %arg6[%c0_11, %c0_12] : memref<256x256xf32, #tpu.memory_space<vmem>>, vector<256x256xf32>
      tpu.vector_store %arg6[%c0_11, %c0_12], %12 {strides = array<i32>} : memref<256x256xf32, #tpu.memory_space<vmem>>, vector<256x256xf32>,
    } else {
    }
    %c0 = arith.constant 0 : index
    %c0_1 = arith.constant 0 : index
    %3 = vector.load %arg6[%c0, %c0_1] : memref<256x256xf32, #tpu.memory_space<vmem>>, vector<256x256xf32>
    %c0_2 = arith.constant 0 : index
    %c0_3 = arith.constant 0 : index
    %4 = vector.load %arg3[%c0_2, %c0_3] : memref<256x256xbf16, #tpu.memory_space<vmem>>, vector<256x256xbf16>
    %c0_4 = arith.constant 0 : index
    %c0_5 = arith.constant 0 : index
    %5 = vector.load %arg4[%c0_4, %c0_5] : memref<256x256xbf16, #tpu.memory_space<vmem>>, vector<256x256xbf16>
    %cst = arith.constant dense<0.000000e+00> : vector<256x256xf32>
    %6 = tpu.matmul %4, %5, %cst {dimension_numbers = #tpu.dot_dimension_numbers<[1], [0], [0], [1], [0, 0, 1, 1], [], []>} : vector<256x256xbf16>, vector<256x256xbf16>, vector<256x256xf32> -> vector<256x256xf32>
    %7 = arith.addf %3, %6 : vector<256x256xf32>
    %c0_6 = arith.constant 0 : index
    %c0_7 = arith.constant 0 : index
    %8 = vector.load %arg6[%c0_6, %c0_7] : memref<256x256xf32, #tpu.memory_space<vmem>>, vector<256x256xf32>
    tpu.vector_store %arg6[%c0_6, %c0_7], %7 {strides = array<i32>} : memref<256x256xf32, #tpu.memory_space<vmem>>, vector<256x256xf32>,
    %c0_i32_8 = arith.constant 0 : i32
    %9 = arith.cmpi eq, %arg2, %c0_i32_8 : i32
    %10 = arith.extui %9 : i1 to i32
    %c0_i32_9 = arith.constant 0 : i32
    %11 = arith.cmpi ne, %10, %c0_i32_9 : i32
    scf.if %11 {
      %c0_10 = arith.constant 0 : index
      %c0_11 = arith.constant 0 : index
      %12 = vector.load %arg6[%c0_10, %c0_11] : memref<256x256xf32, #tpu.memory_space<vmem>>, vector<256x256xf32>
      %13 = arith.truncf %12 : vector<256x256xf32> to vector<256x256xbf16>
      %c0_12 = arith.constant 0 : index
      %c0_13 = arith.constant 0 : index
      %14 = vector.load %arg5[%c0_12, %c0_13] : memref<256x256xbf16, #tpu.memory_space<vmem>>, vector<256x256xbf16>
      tpu.vector_store %arg5[%c0_12, %c0_13], %13 {strides = array<i32>} : memref<256x256xbf16, #tpu.memory_space<vmem>>, vector<256x256xbf16>,
    } else {
    }
    return
  }
  func.func @transform_0(%arg0: i32, %arg1: i32, %arg2: i32) -> (i32, i32) {
    %c0_i32 = arith.constant 0 : i32
    return %arg0, %arg2 : i32, i32
  }
  func.func @transform_1(%arg0: i32, %arg1: i32, %arg2: i32) -> (i32, i32) {
    %c0_i32 = arith.constant 0 : i32
    return %arg2, %arg1 : i32, i32
  }
  func.func @transform_2(%arg0: i32, %arg1: i32, %arg2: i32) -> (i32, i32) {
    %c0_i32 = arith.constant 0 : i32
    return %arg0, %arg1 : i32, i32
  }
}

</mosaic_0001>

<llo_original>
// kernel: tpu_custom_call.1
$region0: #{tpu_custom_call.1}
  #allocation0 [shape = 'u32[]', space=smem, size = 0x4, offset = 0x4, fixed_abs, tag = 'smem constant byte address 0x4 - core index']
  #allocation1 [shape = 'u32[144,128]{1,0:T(1,128)}', space=vmem, size = 0x12000, scoped, tag = 'internal scratch']
  #allocation2 [shape = 'f32[256,256]{1,0:T(8,128)}', space=vmem, size = 0x40000, scoped, tag = 'scratch operand']
  %s0 = inlined_call_operand.hbm [shape: bf16[256,256], index: 0, kind: input, shape index: {}]
  %s1 = inlined_call_operand.hbm [shape: bf16[256,1024], index: 1, kind: input, shape index: {}]
  %s2 = inlined_call_operand.hbm [shape: bf16[256,1024], index: 2, kind: output, shape index: {}]
  %s3 = sld [smem:[#allocation0]]
  $region57: #{tpu_custom_call.1} parent=0
    _
  %s5 = ssub.s32 1, %s3
  %s6 = scalar_select 0, %s5, %s3
  $region1: #{tpu_custom_call.1} parent=0
    #allocation3 [shape = 'u8[131072]{0}', space=vmem, size = 0x20000, scoped, tag = 'input window, operand 0, single buffered']
    #allocation4 [shape = 's32[2]{0}', space=sflag, size = 0x8, scoped, tag = 'scoped memory for tpu_custom_call.1']
    #allocation5 [shape = 's32[2]{0}', space=sflag, size = 0x8, scoped, tag = 'scoped memory for tpu_custom_call.1']
    #allocation6 [shape = 'u8[262144]{0}', space=vmem, size = 0x40000, scoped, tag = 'input window, operand 1']
    #allocation7 [shape = 's32[2]{0}', space=sflag, size = 0x8, scoped, tag = 'scoped memory for tpu_custom_call.1']
    #allocation8 [shape = 'u8[262144]{0}', space=vmem, size = 0x40000, scoped, tag = 'output window, operand 0']
    %7 = vsyncpa [#allocation4], 0
    %8 = vsyncpa [#allocation7], 0
    %s9 = scalar_lea.sflag [#allocation7], 1
    %10 = vsyncpa %s9, 0
    %11 = vsyncpa [#allocation5], 0
    %s12 = scalar_lea.sflag [#allocation5], 1
    %13 = vsyncpa %s12, 0
    loop: start=0, step=1, limit=6
    $region2: #{tpu_custom_call.1} parent=1 // loop_pre_header
      _
    $region3: #{tpu_custom_call.1} parent=1 // loop_header
      %s15 = sphi 0, %s19
      %p16 = scmp.ge.s32.totalorder %s15, 6
      %s22 = sphi 0, %s41
      %s23 = sphi 0, %s37
      %s24 = sphi 0, %s33
      %s25 = sphi 0, %s22
      %s26 = sphi 0, %s23
      %s27 = sphi 0, %s24
      %s28 = sphi 0, %s25
      %s29 = sphi 0, %s26
      %s30 = sphi 0, %s27
      %s46 = sphi 0, %s48
      %s49 = sphi 0, %s46
      %s50 = sphi 0, %s49
      %s66 = sphi 0, %s50
      %s74 = sphi 0, %s76
      %s77 = sphi 0, %s74
      %s78 = sphi 0, %s77
      %s94 = sphi 0, %s78
      %s102 = sphi 0, %s104
      %s105 = sphi 0, %s102
      %s106 = sphi 0, %s105
      %s122 = sphi 0, %s106
    $region4: #{tpu_custom_call.1} parent=1 // loop_header_branch
      %18 = sbr.rel (%p16) target = $region8
    $region5: #{tpu_custom_call.1} parent=1 // loop_body
      %s20 = ssub.s32 %s15, 1
      %s21 = ssub.s32 %s15, 2
      %s31 = sadd.s32 1, %s24
      %p32 = scmp.ge.s32.totalorder %s31, 1
      %s33 = scalar_select %p32, 0, %s31
      %s34 = sadd.s32 1, %s23
      %s35 = scalar_select %p32, %s34, %s23
      %p36 = scmp.ge.s32.totalorder %s35, 4
      %s37 = scalar_select %p36, 0, %s35
      %s38 = sadd.s32 1, %s22
      %s39 = scalar_select %p36, %s38, %s22
      %p40 = scmp.ge.s32.totalorder %s39, 1
      %s41 = scalar_select %p40, 0, %s39
      %s42 = ssub.s32 %s22, %s41
      %s43 = ssub.s32 %s24, %s33
      %s44 = sor.u32 %s42, %s43
      %p45 = scmp.eq.s32.totalorder %s44, 0
      %s47 = sadd.s32 %s46, 1
      %s48 = scalar_select %p45, %s46, %s47
      %p51 = pneg %p45
      %p52 = scmp.eq.s32.totalorder %s15, 3
      %p53 = por %p51, %p52
      %p54 = scmp.ne.s32.totalorder %s46, %s49
      %p55 = scmp.eq.s32.totalorder %s15, 0
      %p56 = por %p54, %p55
      %p57 = scmp.ne.s32.totalorder %s46, %s49
      %p58 = scmp.eq.s32.totalorder %s20, 3
      %p59 = por %p57, %p58
      %p60 = scmp.ne.s32.totalorder %s49, %s50
      %p61 = scmp.eq.s32.totalorder %s20, 0
      %p62 = por %p60, %p61
      %p63 = scmp.ne.s32.totalorder %s49, %s50
      %p64 = scmp.eq.s32.totalorder %s21, 3
      %p65 = por %p63, %p64
      %p67 = scmp.ne.s32.totalorder %s50, %s66
      %p68 = scmp.eq.s32.totalorder %s21, 0
      %p69 = por %p67, %p68
      %s70 = ssub.s32 %s24, %s33
      %s71 = ssub.s32 %s23, %s37
      %s72 = sor.u32 %s70, %s71
      %p73 = scmp.eq.s32.totalorder %s72, 0
      %s75 = sadd.s32 %s74, 1
      %s76 = scalar_select %p73, %s74, %s75
      %p79 = pneg %p73
      %p80 = scmp.eq.s32.totalorder %s15, 3
      %p81 = por %p79, %p80
      %p82 = scmp.ne.s32.totalorder %s74, %s77
      %p83 = scmp.eq.s32.totalorder %s15, 0
      %p84 = por %p82, %p83
      %p85 = scmp.ne.s32.totalorder %s74, %s77
      %p86 = scmp.eq.s32.totalorder %s20, 3
      %p87 = por %p85, %p86
      %p88 = scmp.ne.s32.totalorder %s77, %s78
      %p89 = scmp.eq.s32.totalorder %s20, 0
      %p90 = por %p88, %p89
      %p91 = scmp.ne.s32.totalorder %s77, %s78
      %p92 = scmp.eq.s32.totalorder %s21, 3
      %p93 = por %p91, %p92
      %p95 = scmp.ne.s32.totalorder %s78, %s94
      %p96 = scmp.eq.s32.totalorder %s21, 0
      %p97 = por %p95, %p96
      %s98 = ssub.s32 %s22, %s41
      %s99 = ssub.s32 %s23, %s37
      %s100 = sor.u32 %s98, %s99
      %p101 = scmp.eq.s32.totalorder %s100, 0
      %s103 = sadd.s32 %s102, 1
      %s104 = scalar_select %p101, %s102, %s103
      %p107 = pneg %p101
      %p108 = scmp.eq.s32.totalorder %s15, 3
      %p109 = por %p107, %p108
      %p110 = scmp.ne.s32.totalorder %s102, %s105
      %p111 = scmp.eq.s32.totalorder %s15, 0
      %p112 = por %p110, %p111
      %p113 = scmp.ne.s32.totalorder %s102, %s105
      %p114 = scmp.eq.s32.totalorder %s20, 3
      %p115 = por %p113, %p114
      %p116 = scmp.ne.s32.totalorder %s105, %s106
      %p117 = scmp.eq.s32.totalorder %s20, 0
      %p118 = por %p116, %p117
      %p119 = scmp.ne.s32.totalorder %s105, %s106
      %p120 = scmp.eq.s32.totalorder %s21, 3
      %p121 = por %p119, %p120
      %p123 = scmp.ne.s32.totalorder %s106, %s122
      %p124 = scmp.eq.s32.totalorder %s21, 0
      %p125 = por %p123, %p124
      %p126 = scmp.le.s32.totalorder 1, %s15
      %p127 = scmp.lt.s32.totalorder %s15, 5
      %p128 = pnand %p126, %p127
      %p129 = pneg %p128
      // Predicated region
      $region9: #{tpu_custom_call.1} parent=5 // pred_check
        _
      $region10: #{tpu_custom_call.1} parent=5 // pred_check_branch
        %131 = sbr.rel (%p128) target = $region12
      $region11: #{tpu_custom_call.1} parent=5 // pred_region
        %s132 = ssub.s32 %s15, 1
        // Predicated region
        $region13: #{tpu_custom_call.1} parent=11 // pred_check
          %p133 = pneg %p62
        $region14: #{tpu_custom_call.1} parent=11 // pred_check_branch
          %135 = sbr.rel (%p133) target = $region16
        $region15: #{tpu_custom_call.1} parent=11 // pred_region
          %s136 = smul.u32 32, %s25
          %s137 = smul.u32 2, %s27
          %s139 = ssub.s32 4096, 4096
          %140 = vsyncadd [#allocation4], %s139
          %s141 = smul.addr %s136, 2
          %s142 = sadd.s32 %s137, %s141
          %s143 = smul.addr %s142, 64
          %s144 = scalar_lea.hbm %s0, %s143
          %s145 = sshll.u32 [#allocation3], 4
          %s146 = int_to_ptr.vmem [resolvable:$true] %s145
          %151 = dma.hbm_to_vmem [thread:$0]  %s144, 4096, %s146, [#allocation4], 128, 128, 8
        $region16: #{tpu_custom_call.1} parent=11 // pred_fallthru
          _
      $region12: #{tpu_custom_call.1} parent=5 // pred_fallthru
        _
      %p152 = scmp.lt.s32.totalorder %s15, 4
      // Predicated region
      $region17: #{tpu_custom_call.1} parent=5 // pred_check
        %p153 = pneg %p152
      $region18: #{tpu_custom_call.1} parent=5 // pred_check_branch
        %155 = sbr.rel (%p153) target = $region20
      $region19: #{tpu_custom_call.1} parent=5 // pred_region
        // Predicated region
        $region21: #{tpu_custom_call.1} parent=19 // pred_check
          %p156 = pneg %p84
        $region22: #{tpu_custom_call.1} parent=19 // pred_check_branch
          %158 = sbr.rel (%p156) target = $region24
        $region23: #{tpu_custom_call.1} parent=19 // pred_region
          %s159 = sand.u32 %s74, 1
          %s160 = scalar_lea.sflag [#allocation7], %s159
          %s161 = sand.u32 %s74, 1
          %s162 = smul.addr %s161, 256
          %s163 = scalar_lea.vmem [#allocation6], %s162
          %s164 = smul.u32 32, %s24
          %s165 = smul.u32 2, %s23
          %s167 = ssub.s32 4096, 4096
          %168 = vsyncadd %s160, %s167
          %s169 = smul.addr %s164, 8
          %s170 = sadd.s32 %s165, %s169
          %s171 = smul.addr %s170, 64
          %s172 = scalar_lea.hbm %s1, %s171
          %s173 = sshll.u32 %s163, 4
          %s174 = int_to_ptr.vmem [resolvable:$true] %s173
          %179 = dma.hbm_to_vmem [thread:$0]  %s172, 4096, %s174, %s160, 512, 128, 8
        $region24: #{tpu_custom_call.1} parent=19 // pred_fallthru
          _
      $region20: #{tpu_custom_call.1} parent=5 // pred_fallthru
        _
      %p180 = scmp.le.s32.totalorder 1, %s15
      %p181 = scmp.lt.s32.totalorder %s15, 5
      %p182 = pnand %p180, %p181
      %p183 = pneg %p182
      // Predicated region
      $region25: #{tpu_custom_call.1} parent=5 // pred_check
        _
      $region26: #{tpu_custom_call.1} parent=5 // pred_check_branch
        %185 = sbr.rel (%p182) target = $region28
      $region27: #{tpu_custom_call.1} parent=5 // pred_region
        %s186 = ssub.s32 %s15, 1
        // Predicated region
        $region29: #{tpu_custom_call.1} parent=27 // pred_check
          %p187 = pneg %p62
        $region30: #{tpu_custom_call.1} parent=27 // pred_check_branch
          %189 = sbr.rel (%p187) target = $region32
        $region31: #{tpu_custom_call.1} parent=27 // pred_region
          %190 = dma.done [#allocation4], 4096
        $region32: #{tpu_custom_call.1} parent=27 // pred_fallthru
          _
        %s191 = sand.u32 %s77, 1
        %s192 = scalar_lea.sflag [#allocation7], %s191
        %s193 = sand.u32 %s77, 1
        %s194 = smul.addr %s193, 256
        %s195 = scalar_lea.vmem [#allocation6], %s194
        // Predicated region
        $region33: #{tpu_custom_call.1} parent=27 // pred_check
          %p196 = pneg %p90
        $region34: #{tpu_custom_call.1} parent=27 // pred_check_branch
          %198 = sbr.rel (%p196) target = $region36
        $region35: #{tpu_custom_call.1} parent=27 // pred_region
          %199 = dma.done %s192, 4096
        $region36: #{tpu_custom_call.1} parent=27 // pred_fallthru
          _
        %p200 = pneg %p62
        %p201 = pneg %p59
        %s202 = sand.u32 %s77, 1
        %s203 = scalar_lea.sflag [#allocation7], %s202
        %s204 = sand.u32 %s77, 1
        %s205 = smul.addr %s204, 256
        %s206 = scalar_lea.vmem [#allocation6], %s205
        %p207 = pneg %p90
        %p208 = pneg %p87
        %p209 = pneg %p118
        %p210 = pneg %p115
        %s211 = sand.u32 %s105, 1
        %s212 = scalar_lea.sflag [#allocation5], %s211
        %s213 = sand.u32 %s105, 1
        %s214 = smul.addr %s213, 256
        %s215 = scalar_lea.vmem [#allocation8], %s214
        %s216 = smul.u32 32, %s25
        %s217 = smul.u32 2, %s27
        %s218 = smul.u32 32, %s27
        %s219 = smul.u32 2, %s26
        %s220 = smul.u32 32, %s25
        %s221 = smul.u32 2, %s26
        %p222 = scmp.eq.s32.totalorder %s27, 0
        // Predicated region
        $region37: #{tpu_custom_call.1} parent=27 // pred_check
          %p223 = pneg %p222
        $region38: #{tpu_custom_call.1} parent=27 // pred_check_branch
          %225 = sbr.rel (%p223) target = $region40
        $region39: #{tpu_custom_call.1} parent=27 // pred_region
          %226 = vst [vmem:[#allocation2] sm:$0xff] 0.0
          %227 = vst [vmem:[#allocation2 + $0x8] sm:$0xff] 0.0
          %228 = vst [vmem:[#allocation2 + $0x10] sm:$0xff] 0.0
          %229 = vst [vmem:[#allocation2 + $0x18] sm:$0xff] 0.0
          %230 = vst [vmem:[#allocation2 + $0x20] sm:$0xff] 0.0
          %231 = vst [vmem:[#allocation2 + $0x28] sm:$0xff] 0.0
          %232 = vst [vmem:[#allocation2 + $0x30] sm:$0xff] 0.0
          %233 = vst [vmem:[#allocation2 + $0x38] sm:$0xff] 0.0
          %234 = vst [vmem:[#allocation2 + $0x40] sm:$0xff] 0.0
          %235 = vst [vmem:[#allocation2 + $0x48] sm:$0xff] 0.0
          %236 = vst [vmem:[#allocation2 + $0x50] sm:$0xff] 0.0
          %237 = vst [vmem:[#allocation2 + $0x58] sm:$0xff] 0.0
          %238 = vst [vmem:[#allocation2 + $0x60] sm:$0xff] 0.0
          %239 = vst [vmem:[#allocation2 + $0x68] sm:$0xff] 0.0
          %240 = vst [vmem:[#allocation2 + $0x70] sm:$0xff] 0.0
          %241 = vst [vmem:[#allocation2 + $0x78] sm:$0xff] 0.0
          %242 = vst [vmem:[#allocation2 + $0x80] sm:$0xff] 0.0
          %243 = vst [vmem:[#allocation2 + $0x88] sm:$0xff] 0.0
          %244 = vst [vmem:[#allocation2 + $0x90] sm:$0xff] 0.0
          %245 = vst [vmem:[#allocation2 + $0x98] sm:$0xff] 0.0
          %246 = vst [vmem:[#allocation2 + $0xa0] sm:$0xff] 0.0
          %247 = vst [vmem:[#allocation2 + $0xa8] sm:$0xff] 0.0
          %248 = vst [vmem:[#allocation2 + $0xb0] sm:$0xff] 0.0
          %249 = vst [vmem:[#allocation2 + $0xb8] sm:$0xff] 0.0
          %250 = vst [vmem:[#allocation2 + $0xc0] sm:$0xff] 0.0
          %251 = vst [vmem:[#allocation2 + $0xc8] sm:$0xff] 0.0
          %252 = vst [vmem:[#allocation2 + $0xd0] sm:$0xff] 0.0
          %253 = vst [vmem:[#allocation2 + $0xd8] sm:$0xff] 0.0
          %254 = vst [vmem:[#allocation2 + $0xe0] sm:$0xff] 0.0
          %255 = vst [vmem:[#allocation2 + $0xe8] sm:$0xff] 0.0
          %256 = vst [vmem:[#allocation2 + $0xf0] sm:$0xff] 0.0
          %257 = vst [vmem:[#allocation2 + $0xf8] sm:$0xff] 0.0
          %258 = vst [vmem:[#allocation2 + $0x100] sm:$0xff] 0.0
          %259 = vst [vmem:[#allocation2 + $0x108] sm:$0xff] 0.0
          %260 = vst [vmem:[#allocation2 + $0x110] sm:$0xff] 0.0
          %261 = vst [vmem:[#allocation2 + $0x118] sm:$0xff] 0.0
          %262 = vst [vmem:[#allocation2 + $0x120] sm:$0xff] 0.0
          %263 = vst [vmem:[#allocation2 + $0x128] sm:$0xff] 0.0
          %264 = vst [vmem:[#allocation2 + $0x130] sm:$0xff] 0.0
          %265 = vst [vmem:[#allocation2 + $0x138] sm:$0xff] 0.0
          %266 = vst [vmem:[#allocation2 + $0x140] sm:$0xff] 0.0
          %267 = vst [vmem:[#allocation2 + $0x148] sm:$0xff] 0.0
          %268 = vst [vmem:[#allocation2 + $0x150] sm:$0xff] 0.0
          %269 = vst [vmem:[#allocation2 + $0x158] sm:$0xff] 0.0
          %270 = vst [vmem:[#allocation2 + $0x160] sm:$0xff] 0.0
          %271 = vst [vmem:[#allocation2 + $0x168] sm:$0xff] 0.0
          %272 = vst [vmem:[#allocation2 + $0x170] sm:$0xff] 0.0
          %273 = vst [vmem:[#allocation2 + $0x178] sm:$0xff] 0.0
          %274 = vst [vmem:[#allocation2 + $0x180] sm:$0xff] 0.0
          %275 = vst [vmem:[#allocation2 + $0x188] sm:$0xff] 0.0
          %276 = vst [vmem:[#allocation2 + $0x190] sm:$0xff] 0.0
          %277 = vst [vmem:[#allocation2 + $0x198] sm:$0xff] 0.0
          %278 = vst [vmem:[#allocation2 + $0x1a0] sm:$0xff] 0.0
          %279 = vst [vmem:[#allocation2 + $0x1a8] sm:$0xff] 0.0
          %280 = vst [vmem:[#allocation2 + $0x1b0] sm:$0xff] 0.0
          %281 = vst [vmem:[#allocation2 + $0x1b8] sm:$0xff] 0.0
          %282 = vst [vmem:[#allocation2 + $0x1c0] sm:$0xff] 0.0
          %283 = vst [vmem:[#allocation2 + $0x1c8] sm:$0xff] 0.0
          %284 = vst [vmem:[#allocation2 + $0x1d0] sm:$0xff] 0.0
          %285 = vst [vmem:[#allocation2 + $0x1d8] sm:$0xff] 0.0
          %286 = vst [vmem:[#allocation2 + $0x1e0] sm:$0xff] 0.0
          %287 = vst [vmem:[#allocation2 + $0x1e8] sm:$0xff] 0.0
          %288 = vst [vmem:[#allocation2 + $0x1f0] sm:$0xff] 0.0
          %289 = vst [vmem:[#allocation2 + $0x1f8] sm:$0xff] 0.0
        $region40: #{tpu_custom_call.1} parent=27 // pred_fallthru
          _
        %v290 = vld [vmem:[#allocation2] sm:$0xff]
        %v291 = vld [vmem:[#allocation2 + $0x8] sm:$0xff]
        %v292 = vld [vmem:[#allocation2 + $0x10] sm:$0xff]
        %v293 = vld [vmem:[#allocation2 + $0x18] sm:$0xff]
        %v294 = vld [vmem:[#allocation2 + $0x20] sm:$0xff]
        %v295 = vld [vmem:[#allocation2 + $0x28] sm:$0xff]
        %v296 = vld [vmem:[#allocation2 + $0x30] sm:$0xff]
        %v297 = vld [vmem:[#allocation2 + $0x38] sm:$0xff]
        %v298 = vld [vmem:[#allocation2 + $0x40] sm:$0xff]
        %v299 = vld [vmem:[#allocation2 + $0x48] sm:$0xff]
        %v300 = vld [vmem:[#allocation2 + $0x50] sm:$0xff]
        %v301 = vld [vmem:[#allocation2 + $0x58] sm:$0xff]
        %v302 = vld [vmem:[#allocation2 + $0x60] sm:$0xff]
        %v303 = vld [vmem:[#allocation2 + $0x68] sm:$0xff]
        %v304 = vld [vmem:[#allocation2 + $0x70] sm:$0xff]
        %v305 = vld [vmem:[#allocation2 + $0x78] sm:$0xff]
        %v306 = vld [vmem:[#allocation2 + $0x80] sm:$0xff]
        %v307 = vld [vmem:[#allocation2 + $0x88] sm:$0xff]
        %v308 = vld [vmem:[#allocation2 + $0x90] sm:$0xff]
        %v309 = vld [vmem:[#allocation2 + $0x98] sm:$0xff]
        %v310 = vld [vmem:[#allocation2 + $0xa0] sm:$0xff]
        %v311 = vld [vmem:[#allocation2 + $0xa8] sm:$0xff]
        %v312 = vld [vmem:[#allocation2 + $0xb0] sm:$0xff]
        %v313 = vld [vmem:[#allocation2 + $0xb8] sm:$0xff]
        %v314 = vld [vmem:[#allocation2 + $0xc0] sm:$0xff]
        %v315 = vld [vmem:[#allocation2 + $0xc8] sm:$0xff]
        %v316 = vld [vmem:[#allocation2 + $0xd0] sm:$0xff]
        %v317 = vld [vmem:[#allocation2 + $0xd8] sm:$0xff]
        %v318 = vld [vmem:[#allocation2 + $0xe0] sm:$0xff]
        %v319 = vld [vmem:[#allocation2 + $0xe8] sm:$0xff]
        %v320 = vld [vmem:[#allocation2 + $0xf0] sm:$0xff]
        %v321 = vld [vmem:[#allocation2 + $0xf8] sm:$0xff]
        %v322 = vld [vmem:[#allocation2 + $0x100] sm:$0xff]
        %v323 = vld [vmem:[#allocation2 + $0x108] sm:$0xff]
        %v324 = vld [vmem:[#allocation2 + $0x110] sm:$0xff]
        %v325 = vld [vmem:[#allocation2 + $0x118] sm:$0xff]
        %v326 = vld [vmem:[#allocation2 + $0x120] sm:$0xff]
        %v327 = vld [vmem:[#allocation2 + $0x128] sm:$0xff]
        %v328 = vld [vmem:[#allocation2 + $0x130] sm:$0xff]
        %v329 = vld [vmem:[#allocation2 + $0x138] sm:$0xff]
        %v330 = vld [vmem:[#allocation2 + $0x140] sm:$0xff]
        %v331 = vld [vmem:[#allocation2 + $0x148] sm:$0xff]
        %v332 = vld [vmem:[#allocation2 + $0x150] sm:$0xff]
        %v333 = vld [vmem:[#allocation2 + $0x158] sm:$0xff]
        %v334 = vld [vmem:[#allocation2 + $0x160] sm:$0xff]
        %v335 = vld [vmem:[#allocation2 + $0x168] sm:$0xff]
        %v336 = vld [vmem:[#allocation2 + $0x170] sm:$0xff]
        %v337 = vld [vmem:[#allocation2 + $0x178] sm:$0xff]
        %v338 = vld [vmem:[#allocation2 + $0x180] sm:$0xff]
        %v339 = vld [vmem:[#allocation2 + $0x188] sm:$0xff]
        %v340 = vld [vmem:[#allocation2 + $0x190] sm:$0xff]
        %v341 = vld [vmem:[#allocation2 + $0x198] sm:$0xff]
        %v342 = vld [vmem:[#allocation2 + $0x1a0] sm:$0xff]
        %v343 = vld [vmem:[#allocation2 + $0x1a8] sm:$0xff]
        %v344 = vld [vmem:[#allocation2 + $0x1b0] sm:$0xff]
        %v345 = vld [vmem:[#allocation2 + $0x1b8] sm:$0xff]
        %v346 = vld [vmem:[#allocation2 + $0x1c0] sm:$0xff]
        %v347 = vld [vmem:[#allocation2 + $0x1c8] sm:$0xff]
        %v348 = vld [vmem:[#allocation2 + $0x1d0] sm:$0xff]
        %v349 = vld [vmem:[#allocation2 + $0x1d8] sm:$0xff]
        %v350 = vld [vmem:[#allocation2 + $0x1e0] sm:$0xff]
        %v351 = vld [vmem:[#allocation2 + $0x1e8] sm:$0xff]
        %v352 = vld [vmem:[#allocation2 + $0x1f0] sm:$0xff]
        %v353 = vld [vmem:[#allocation2 + $0x1f8] sm:$0xff]
        %v354 = vld [vmem:[#allocation3] sm:$0xff]
        %v355 = vld [vmem:[#allocation3 + $0x8] sm:$0xff]
        %v356 = vld [vmem:[#allocation3 + $0x10] sm:$0xff]
        %v357 = vld [vmem:[#allocation3 + $0x18] sm:$0xff]
        %v358 = vld [vmem:[#allocation3 + $0x20] sm:$0xff]
        %v359 = vld [vmem:[#allocation3 + $0x28] sm:$0xff]
        %v360 = vld [vmem:[#allocation3 + $0x30] sm:$0xff]
        %v361 = vld [vmem:[#allocation3 + $0x38] sm:$0xff]
        %v362 = vld [vmem:[#allocation3 + $0x40] sm:$0xff]
        %v363 = vld [vmem:[#allocation3 + $0x48] sm:$0xff]
        %v364 = vld [vmem:[#allocation3 + $0x50] sm:$0xff]
        %v365 = vld [vmem:[#allocation3 + $0x58] sm:$0xff]
        %v366 = vld [vmem:[#allocation3 + $0x60] sm:$0xff]
        %v367 = vld [vmem:[#allocation3 + $0x68] sm:$0xff]
        %v368 = vld [vmem:[#allocation3 + $0x70] sm:$0xff]
        %v369 = vld [vmem:[#allocation3 + $0x78] sm:$0xff]
        %v370 = vld [vmem:[#allocation3 + $0x80] sm:$0xff]
        %v371 = vld [vmem:[#allocation3 + $0x88] sm:$0xff]
        %v372 = vld [vmem:[#allocation3 + $0x90] sm:$0xff]
        %v373 = vld [vmem:[#allocation3 + $0x98] sm:$0xff]
        %v374 = vld [vmem:[#allocation3 + $0xa0] sm:$0xff]
        %v375 = vld [vmem:[#allocation3 + $0xa8] sm:$0xff]
        %v376 = vld [vmem:[#allocation3 + $0xb0] sm:$0xff]
        %v377 = vld [vmem:[#allocation3 + $0xb8] sm:$0xff]
        %v378 = vld [vmem:[#allocation3 + $0xc0] sm:$0xff]
        %v379 = vld [vmem:[#allocation3 + $0xc8] sm:$0xff]
        %v380 = vld [vmem:[#allocation3 + $0xd0] sm:$0xff]
        %v381 = vld [vmem:[#allocation3 + $0xd8] sm:$0xff]
        %v382 = vld [vmem:[#allocation3 + $0xe0] sm:$0xff]
        %v383 = vld [vmem:[#allocation3 + $0xe8] sm:$0xff]
        %v384 = vld [vmem:[#allocation3 + $0xf0] sm:$0xff]
        %v385 = vld [vmem:[#allocation3 + $0xf8] sm:$0xff]
        %v386 = vld [vmem:[%s195] sm:$0xff]
        %v387 = vld [vmem:[%s195 + $0x8] sm:$0xff]
        %v388 = vld [vmem:[%s195 + $0x10] sm:$0xff]
        %v389 = vld [vmem:[%s195 + $0x18] sm:$0xff]
        %v390 = vld [vmem:[%s195 + $0x20] sm:$0xff]
        %v391 = vld [vmem:[%s195 + $0x28] sm:$0xff]
        %v392 = vld [vmem:[%s195 + $0x30] sm:$0xff]
        %v393 = vld [vmem:[%s195 + $0x38] sm:$0xff]
        %v394 = vld [vmem:[%s195 + $0x40] sm:$0xff]
        %v395 = vld [vmem:[%s195 + $0x48] sm:$0xff]
        %v396 = vld [vmem:[%s195 + $0x50] sm:$0xff]
        %v397 = vld [vmem:[%s195 + $0x58] sm:$0xff]
        %v398 = vld [vmem:[%s195 + $0x60] sm:$0xff]
        %v399 = vld [vmem:[%s195 + $0x68] sm:$0xff]
        %v400 = vld [vmem:[%s195 + $0x70] sm:$0xff]
        %v401 = vld [vmem:[%s195 + $0x78] sm:$0xff]
        %v402 = vld [vmem:[%s195 + $0x80] sm:$0xff]
        %v403 = vld [vmem:[%s195 + $0x88] sm:$0xff]
        %v404 = vld [vmem:[%s195 + $0x90] sm:$0xff]
        %v405 = vld [vmem:[%s195 + $0x98] sm:$0xff]
        %v406 = vld [vmem:[%s195 + $0xa0] sm:$0xff]
        %v407 = vld [vmem:[%s195 + $0xa8] sm:$0xff]
        %v408 = vld [vmem:[%s195 + $0xb0] sm:$0xff]
        %v409 = vld [vmem:[%s195 + $0xb8] sm:$0xff]
        %v410 = vld [vmem:[%s195 + $0xc0] sm:$0xff]
        %v411 = vld [vmem:[%s195 + $0xc8] sm:$0xff]
        %v412 = vld [vmem:[%s195 + $0xd0] sm:$0xff]
        %v413 = vld [vmem:[%s195 + $0xd8] sm:$0xff]
        %v414 = vld [vmem:[%s195 + $0xe0] sm:$0xff]
        %v415 = vld [vmem:[%s195 + $0xe8] sm:$0xff]
        %v416 = vld [vmem:[%s195 + $0xf0] sm:$0xff]
        %v417 = vld [vmem:[%s195 + $0xf8] sm:$0xff]
        %v450 = vunpack.c.l.b16 %v354
        %v451 = vunpack.c.h.b16 %v354
        %v452 = vunpack.c.l.b16 %v355
        %v453 = vunpack.c.h.b16 %v355
        %v454 = vunpack.c.l.b16 %v356
        %v455 = vunpack.c.h.b16 %v356
        %v456 = vunpack.c.l.b16 %v357
        %v457 = vunpack.c.h.b16 %v357
        %v458 = vunpack.c.l.b16 %v358
        %v459 = vunpack.c.h.b16 %v358
        %v460 = vunpack.c.l.b16 %v359
        %v461 = vunpack.c.h.b16 %v359
        %v462 = vunpack.c.l.b16 %v360
        %v463 = vunpack.c.h.b16 %v360
        %v464 = vunpack.c.l.b16 %v361
        %v465 = vunpack.c.h.b16 %v361
        %v466 = vunpack.c.l.b16 %v362
        %v467 = vunpack.c.h.b16 %v362
        %v468 = vunpack.c.l.b16 %v363
        %v469 = vunpack.c.h.b16 %v363
        %v470 = vunpack.c.l.b16 %v364
        %v471 = vunpack.c.h.b16 %v364
        %v472 = vunpack.c.l.b16 %v365
        %v473 = vunpack.c.h.b16 %v365
        %v474 = vunpack.c.l.b16 %v366
        %v475 = vunpack.c.h.b16 %v366
        %v476 = vunpack.c.l.b16 %v367
        %v477 = vunpack.c.h.b16 %v367
        %v478 = vunpack.c.l.b16 %v368
        %v479 = vunpack.c.h.b16 %v368
        %v480 = vunpack.c.l.b16 %v369
        %v481 = vunpack.c.h.b16 %v369
        %v482 = vunpack.c.l.b16 %v370
        %v483 = vunpack.c.h.b16 %v370
        %v484 = vunpack.c.l.b16 %v371
        %v485 = vunpack.c.h.b16 %v371
        %v486 = vunpack.c.l.b16 %v372
        %v487 = vunpack.c.h.b16 %v372
        %v488 = vunpack.c.l.b16 %v373
        %v489 = vunpack.c.h.b16 %v373
        %v490 = vunpack.c.l.b16 %v374
        %v491 = vunpack.c.h.b16 %v374
        %v492 = vunpack.c.l.b16 %v375
        %v493 = vunpack.c.h.b16 %v375
        %v494 = vunpack.c.l.b16 %v376
        %v495 = vunpack.c.h.b16 %v376
        %v496 = vunpack.c.l.b16 %v377
        %v497 = vunpack.c.h.b16 %v377
        %v498 = vunpack.c.l.b16 %v378
        %v499 = vunpack.c.h.b16 %v378
        %v500 = vunpack.c.l.b16 %v379
        %v501 = vunpack.c.h.b16 %v379
        %v502 = vunpack.c.l.b16 %v380
        %v503 = vunpack.c.h.b16 %v380
        %v504 = vunpack.c.l.b16 %v381
        %v505 = vunpack.c.h.b16 %v381
        %v506 = vunpack.c.l.b16 %v382
        %v507 = vunpack.c.h.b16 %v382
        %v508 = vunpack.c.l.b16 %v383
        %v509 = vunpack.c.h.b16 %v383
        %v510 = vunpack.c.l.b16 %v384
        %v511 = vunpack.c.h.b16 %v384
        %v512 = vunpack.c.l.b16 %v385
        %v513 = vunpack.c.h.b16 %v385
        %v514 = vpack.c.b16 %v452, %v450
        %v515 = vpack.c.b16 %v453, %v451
        %v516 = vpack.c.b16 %v456, %v454
        %v517 = vpack.c.b16 %v457, %v455
        %v518 = vpack.c.b16 %v460, %v458
        %v519 = vpack.c.b16 %v461, %v459
        %v520 = vpack.c.b16 %v464, %v462
        %v521 = vpack.c.b16 %v465, %v463
        %v522 = vpack.c.b16 %v468, %v466
        %v523 = vpack.c.b16 %v469, %v467
        %v524 = vpack.c.b16 %v472, %v470
        %v525 = vpack.c.b16 %v473, %v471
        %v526 = vpack.c.b16 %v476, %v474
        %v527 = vpack.c.b16 %v477, %v475
        %v528 = vpack.c.b16 %v480, %v478
        %v529 = vpack.c.b16 %v481, %v479
        %v530 = vpack.c.b16 %v484, %v482
        %v531 = vpack.c.b16 %v485, %v483
        %v532 = vpack.c.b16 %v488, %v486
        %v533 = vpack.c.b16 %v489, %v487
        %v534 = vpack.c.b16 %v492, %v490
        %v535 = vpack.c.b16 %v493, %v491
        %v536 = vpack.c.b16 %v496, %v494
        %v537 = vpack.c.b16 %v497, %v495
        %v538 = vpack.c.b16 %v500, %v498
        %v539 = vpack.c.b16 %v501, %v499
        %v540 = vpack.c.b16 %v504, %v502
        %v541 = vpack.c.b16 %v505, %v503
        %v542 = vpack.c.b16 %v508, %v506
        %v543 = vpack.c.b16 %v509, %v507
        %v544 = vpack.c.b16 %v512, %v510
        %v545 = vpack.c.b16 %v513, %v511
        %v610 = vunpack.c.l.b16 %v386
        %v611 = vunpack.c.h.b16 %v386
        %v612 = vunpack.c.l.b16 %v387
        %v613 = vunpack.c.h.b16 %v387
        %v614 = vunpack.c.l.b16 %v388
        %v615 = vunpack.c.h.b16 %v388
        %v616 = vunpack.c.l.b16 %v389
        %v617 = vunpack.c.h.b16 %v389
        %v618 = vunpack.c.l.b16 %v390
        %v619 = vunpack.c.h.b16 %v390
        %v620 = vunpack.c.l.b16 %v391
        %v621 = vunpack.c.h.b16 %v391
        %v622 = vunpack.c.l.b16 %v392
        %v623 = vunpack.c.h.b16 %v392
        %v624 = vunpack.c.l.b16 %v393
        %v625 = vunpack.c.h.b16 %v393
        %v626 = vunpack.c.l.b16 %v394
        %v627 = vunpack.c.h.b16 %v394
        %v628 = vunpack.c.l.b16 %v395
        %v629 = vunpack.c.h.b16 %v395
        %v630 = vunpack.c.l.b16 %v396
        %v631 = vunpack.c.h.b16 %v396
        %v632 = vunpack.c.l.b16 %v397
        %v633 = vunpack.c.h.b16 %v397
        %v634 = vunpack.c.l.b16 %v398
        %v635 = vunpack.c.h.b16 %v398
        %v636 = vunpack.c.l.b16 %v399
        %v637 = vunpack.c.h.b16 %v399
        %v638 = vunpack.c.l.b16 %v400
        %v639 = vunpack.c.h.b16 %v400
        %v640 = vunpack.c.l.b16 %v401
        %v641 = vunpack.c.h.b16 %v401
        %v642 = vunpack.c.l.b16 %v402
        %v643 = vunpack.c.h.b16 %v402
        %v644 = vunpack.c.l.b16 %v403
        %v645 = vunpack.c.h.b16 %v403
        %v646 = vunpack.c.l.b16 %v404
        %v647 = vunpack.c.h.b16 %v404
        %v648 = vunpack.c.l.b16 %v405
        %v649 = vunpack.c.h.b16 %v405
        %v650 = vunpack.c.l.b16 %v406
        %v651 = vunpack.c.h.b16 %v406
        %v652 = vunpack.c.l.b16 %v407
        %v653 = vunpack.c.h.b16 %v407
        %v654 = vunpack.c.l.b16 %v408
        %v655 = vunpack.c.h.b16 %v408
        %v656 = vunpack.c.l.b16 %v409
        %v657 = vunpack.c.h.b16 %v409
        %v658 = vunpack.c.l.b16 %v410
        %v659 = vunpack.c.h.b16 %v410
        %v660 = vunpack.c.l.b16 %v411
        %v661 = vunpack.c.h.b16 %v411
        %v662 = vunpack.c.l.b16 %v412
        %v663 = vunpack.c.h.b16 %v412
        %v664 = vunpack.c.l.b16 %v413
        %v665 = vunpack.c.h.b16 %v413
        %v666 = vunpack.c.l.b16 %v414
        %v667 = vunpack.c.h.b16 %v414
        %v668 = vunpack.c.l.b16 %v415
        %v669 = vunpack.c.h.b16 %v415
        %v670 = vunpack.c.l.b16 %v416
        %v671 = vunpack.c.h.b16 %v416
        %v672 = vunpack.c.l.b16 %v417
        %v673 = vunpack.c.h.b16 %v417
        %v674 = vpack.c.b16 %v612, %v610
        %v675 = vpack.c.b16 %v613, %v611
        %v676 = vpack.c.b16 %v616, %v614
        %v677 = vpack.c.b16 %v617, %v615
        %v678 = vpack.c.b16 %v620, %v618
        %v679 = vpack.c.b16 %v621, %v619
        %v680 = vpack.c.b16 %v624, %v622
        %v681 = vpack.c.b16 %v625, %v623
        %v682 = vpack.c.b16 %v628, %v626
        %v683 = vpack.c.b16 %v629, %v627
        %v684 = vpack.c.b16 %v632, %v630
        %v685 = vpack.c.b16 %v633, %v631
        %v686 = vpack.c.b16 %v636, %v634
        %v687 = vpack.c.b16 %v637, %v635
        %v688 = vpack.c.b16 %v640, %v638
        %v689 = vpack.c.b16 %v641, %v639
        %v690 = vpack.c.b16 %v644, %v642
        %v691 = vpack.c.b16 %v645, %v643
        %v692 = vpack.c.b16 %v648, %v646
        %v693 = vpack.c.b16 %v649, %v647
        %v694 = vpack.c.b16 %v652, %v650
        %v695 = vpack.c.b16 %v653, %v651
        %v696 = vpack.c.b16 %v656, %v654
        %v697 = vpack.c.b16 %v657, %v655
        %v698 = vpack.c.b16 %v660, %v658
        %v699 = vpack.c.b16 %v661, %v659
        %v700 = vpack.c.b16 %v664, %v662
        %v701 = vpack.c.b16 %v665, %v663
        %v702 = vpack.c.b16 %v668, %v666
        %v703 = vpack.c.b16 %v669, %v667
        %v704 = vpack.c.b16 %v672, %v670
        %v705 = vpack.c.b16 %v673, %v671
        %738 = vmatprep.subr.bf16.mxu0 %v675
        %739 = vmatpush1.bf16.msra.mxu0 %v674
        %740 = vmatprep.subr.bf16.mxu0 %v677
        %741 = vmatpush1.bf16.msra.mxu0 %v676
        %742 = vmatprep.subr.bf16.mxu0 %v679
        %743 = vmatpush1.bf16.msra.mxu0 %v678
        %744 = vmatprep.subr.bf16.mxu0 %v681
        %745 = vmatpush1.bf16.msra.mxu0 %v680
        %746 = vmatprep.subr.bf16.mxu0 %v683
        %747 = vmatpush1.bf16.msra.mxu0 %v682
        %748 = vmatprep.subr.bf16.mxu0 %v685
        %749 = vmatpush1.bf16.msra.mxu0 %v684
        %750 = vmatprep.subr.bf16.mxu0 %v687
        %751 = vmatpush1.bf16.msra.mxu0 %v686
        %752 = vmatprep.subr.bf16.mxu0 %v689
        %753 = vmatpush1.bf16.msra.mxu0 %v688
        %754 = vmatprep.subr.bf16.mxu0 %v691
        %755 = vmatpush1.bf16.msra.mxu0 %v690
        %756 = vmatprep.subr.bf16.mxu0 %v693
        %757 = vmatpush1.bf16.msra.mxu0 %v692
        %758 = vmatprep.subr.bf16.mxu0 %v695
        %759 = vmatpush1.bf16.msra.mxu0 %v694
        %760 = vmatprep.subr.bf16.mxu0 %v697
        %761 = vmatpush1.bf16.msra.mxu0 %v696
        %762 = vmatprep.subr.bf16.mxu0 %v699
        %763 = vmatpush1.bf16.msra.mxu0 %v698
        %764 = vmatprep.subr.bf16.mxu0 %v701
        %765 = vmatpush1.bf16.msra.mxu0 %v700
        %766 = vmatprep.subr.bf16.mxu0 %v703
        %767 = vmatpush1.bf16.msra.mxu0 %v702
        %768 = vmatprep.subr.bf16.mxu0 %v705
        %769 = vmatpush1.bf16.msra.mxu0 %v704
        %770 = vmatprep.mubr.bf16.mxu0 %v515
        %771 = vmatmul.mubr.bf16.gmra.mrb[0].mxu0 %v514
        %v772 = vpop.f32.mrb[0].mxu0
        %v773 = vadd.f32 0.0, %v772
        %v774 = vpop.f32.mrb[0].mxu0
        %v775 = vadd.f32 0.0, %v774
        %v776 = vpop.f32.mrb[0].mxu0
        %v777 = vadd.f32 0.0, %v776
        %v778 = vpop.f32.mrb[0].mxu0
        %v779 = vadd.f32 0.0, %v778
        %780 = vmatprep.mubr.bf16.mxu0 %v517
        %781 = vmatmul.mubr.bf16.gmra.mrb[0].mxu0 %v516
        %v782 = vpop.f32.mrb[0].mxu0
        %v783 = vadd.f32 0.0, %v782
        %v784 = vpop.f32.mrb[0].mxu0
        %v785 = vadd.f32 0.0, %v784
        %v786 = vpop.f32.mrb[0].mxu0
        %v787 = vadd.f32 0.0, %v786
        %v788 = vpop.f32.mrb[0].mxu0
        %v789 = vadd.f32 0.0, %v788
        %790 = vmatprep.mubr.bf16.mxu0 %v519
        %791 = vmatmul.mubr.bf16.gmra.mrb[0].mxu0 %v518
        %v792 = vpop.f32.mrb[0].mxu0
        %v793 = vadd.f32 0.0, %v792
        %v794 = vpop.f32.mrb[0].mxu0
        %v795 = vadd.f32 0.0, %v794
        %v796 = vpop.f32.mrb[0].mxu0
        %v797 = vadd.f32 0.0, %v796
        %v798 = vpop.f32.mrb[0].mxu0
        %v799 = vadd.f32 0.0, %v798
        %800 = vmatprep.mubr.bf16.mxu0 %v521
        %801 = vmatmul.mubr.bf16.gmra.mrb[0].mxu0 %v520
        %v802 = vpop.f32.mrb[0].mxu0
        %v803 = vadd.f32 0.0, %v802
        %v804 = vpop.f32.mrb[0].mxu0
        %v805 = vadd.f32 0.0, %v804
        %v806 = vpop.f32.mrb[0].mxu0
        %v807 = vadd.f32 0.0, %v806
        %v808 = vpop.f32.mrb[0].mxu0
        %v809 = vadd.f32 0.0, %v808
        %810 = vmatprep.mubr.bf16.mxu0 %v523
        %811 = vmatmul.mubr.bf16.gmra.mrb[0].mxu0 %v522
        %v812 = vpop.f32.mrb[0].mxu0
        %v813 = vadd.f32 0.0, %v812
        %v814 = vpop.f32.mrb[0].mxu0
        %v815 = vadd.f32 0.0, %v814
        %v816 = vpop.f32.mrb[0].mxu0
        %v817 = vadd.f32 0.0, %v816
        %v818 = vpop.f32.mrb[0].mxu0
        %v819 = vadd.f32 0.0, %v818
        %820 = vmatprep.mubr.bf16.mxu0 %v525
        %821 = vmatmul.mubr.bf16.gmra.mrb[0].mxu0 %v524
        %v822 = vpop.f32.mrb[0].mxu0
        %v823 = vadd.f32 0.0, %v822
        %v824 = vpop.f32.mrb[0].mxu0
        %v825 = vadd.f32 0.0, %v824
        %v826 = vpop.f32.mrb[0].mxu0
        %v827 = vadd.f32 0.0, %v826
        %v828 = vpop.f32.mrb[0].mxu0
        %v829 = vadd.f32 0.0, %v828
        %830 = vmatprep.mubr.bf16.mxu0 %v527
        %831 = vmatmul.mubr.bf16.gmra.mrb[0].mxu0 %v526
        %v832 = vpop.f32.mrb[0].mxu0
        %v833 = vadd.f32 0.0, %v832
        %v834 = vpop.f32.mrb[0].mxu0
        %v835 = vadd.f32 0.0, %v834
        %v836 = vpop.f32.mrb[0].mxu0
        %v837 = vadd.f32 0.0, %v836
        %v838 = vpop.f32.mrb[0].mxu0
        %v839 = vadd.f32 0.0, %v838
        %840 = vmatprep.mubr.bf16.mxu0 %v529
        %841 = vmatmul.mubr.bf16.gmra.mrb[0].mxu0 %v528
        %v842 = vpop.f32.mrb[0].mxu0
        %v843 = vadd.f32 0.0, %v842
        %v844 = vpop.f32.mrb[0].mxu0
        %v845 = vadd.f32 0.0, %v844
        %v846 = vpop.f32.mrb[0].mxu0
        %v847 = vadd.f32 0.0, %v846
        %v848 = vpop.f32.mrb[0].mxu0
        %v849 = vadd.f32 0.0, %v848
        %850 = vmatprep.mubr.bf16.mxu0 %v531
        %851 = vmatmul.mubr.bf16.gmra.mrb[0].mxu0 %v530
        %v852 = vpop.f32.mrb[0].mxu0
        %v853 = vadd.f32 0.0, %v852
        %v854 = vpop.f32.mrb[0].mxu0
        %v855 = vadd.f32 0.0, %v854
        %v856 = vpop.f32.mrb[0].mxu0
        %v857 = vadd.f32 0.0, %v856
        %v858 = vpop.f32.mrb[0].mxu0
        %v859 = vadd.f32 0.0, %v858
        %860 = vmatprep.mubr.bf16.mxu0 %v533
        %861 = vmatmul.mubr.bf16.gmra.mrb[0].mxu0 %v532
        %v862 = vpop.f32.mrb[0].mxu0
        %v863 = vadd.f32 0.0, %v862
        %v864 = vpop.f32.mrb[0].mxu0
        %v865 = vadd.f32 0.0, %v864
        %v866 = vpop.f32.mrb[0].mxu0
        %v867 = vadd.f32 0.0, %v866
        %v868 = vpop.f32.mrb[0].mxu0
        %v869 = vadd.f32 0.0, %v868
        %870 = vmatprep.mubr.bf16.mxu0 %v535
        %871 = vmatmul.mubr.bf16.gmra.mrb[0].mxu0 %v534
        %v872 = vpop.f32.mrb[0].mxu0
        %v873 = vadd.f32 0.0, %v872
        %v874 = vpop.f32.mrb[0].mxu0
        %v875 = vadd.f32 0.0, %v874
        %v876 = vpop.f32.mrb[0].mxu0
        %v877 = vadd.f32 0.0, %v876
        %v878 = vpop.f32.mrb[0].mxu0
        %v879 = vadd.f32 0.0, %v878
        %880 = vmatprep.mubr.bf16.mxu0 %v537
        %881 = vmatmul.mubr.bf16.gmra.mrb[0].mxu0 %v536
        %v882 = vpop.f32.mrb[0].mxu0
        %v883 = vadd.f32 0.0, %v882
        %v884 = vpop.f32.mrb[0].mxu0
        %v885 = vadd.f32 0.0, %v884
        %v886 = vpop.f32.mrb[0].mxu0
        %v887 = vadd.f32 0.0, %v886
        %v888 = vpop.f32.mrb[0].mxu0
        %v889 = vadd.f32 0.0, %v888
        %890 = vmatprep.mubr.bf16.mxu0 %v539
        %891 = vmatmul.mubr.bf16.gmra.mrb[0].mxu0 %v538
        %v892 = vpop.f32.mrb[0].mxu0
        %v893 = vadd.f32 0.0, %v892
        %v894 = vpop.f32.mrb[0].mxu0
        %v895 = vadd.f32 0.0, %v894
        %v896 = vpop.f32.mrb[0].mxu0
        %v897 = vadd.f32 0.0, %v896
        %v898 = vpop.f32.mrb[0].mxu0
        %v899 = vadd.f32 0.0, %v898
        %900 = vmatprep.mubr.bf16.mxu0 %v541
        %901 = vmatmul.mubr.bf16.gmra.mrb[0].mxu0 %v540
        %v902 = vpop.f32.mrb[0].mxu0
        %v903 = vadd.f32 0.0, %v902
        %v904 = vpop.f32.mrb[0].mxu0
        %v905 = vadd.f32 0.0, %v904
        %v906 = vpop.f32.mrb[0].mxu0
        %v907 = vadd.f32 0.0, %v906
        %v908 = vpop.f32.mrb[0].mxu0
        %v909 = vadd.f32 0.0, %v908
        %910 = vmatprep.mubr.bf16.mxu0 %v543
        %911 = vmatmul.mubr.bf16.gmra.mrb[0].mxu0 %v542
        %v912 = vpop.f32.mrb[0].mxu0
        %v913 = vadd.f32 0.0, %v912
        %v914 = vpop.f32.mrb[0].mxu0
        %v915 = vadd.f32 0.0, %v914
        %v916 = vpop.f32.mrb[0].mxu0
        %v917 = vadd.f32 0.0, %v916
        %v918 = vpop.f32.mrb[0].mxu0
        %v919 = vadd.f32 0.0, %v918
        %920 = vmatprep.mubr.bf16.mxu0 %v545
        %921 = vmatmul.mubr.bf16.gmra.mrb[0].mxu0 %v544
        %v922 = vpop.f32.mrb[0].mxu0
        %v923 = vadd.f32 0.0, %v922
        %v924 = vpop.f32.mrb[0].mxu0
        %v925 = vadd.f32 0.0, %v924
        %v926 = vpop.f32.mrb[0].mxu0
        %v927 = vadd.f32 0.0, %v926
        %v928 = vpop.f32.mrb[0].mxu0
        %v929 = vadd.f32 0.0, %v928
        %930 = vdwg.mxu0
        %v931 = vadd.f32 %v290, %v773
        %v932 = vadd.f32 %v291, %v775
        %v933 = vadd.f32 %v292, %v777
        %v934 = vadd.f32 %v293, %v779
        %v935 = vadd.f32 %v294, %v783
        %v936 = vadd.f32 %v295, %v785
        %v937 = vadd.f32 %v296, %v787
        %v938 = vadd.f32 %v297, %v789
        %v939 = vadd.f32 %v298, %v793
        %v940 = vadd.f32 %v299, %v795
        %v941 = vadd.f32 %v300, %v797
        %v942 = vadd.f32 %v301, %v799
        %v943 = vadd.f32 %v302, %v803
        %v944 = vadd.f32 %v303, %v805
        %v945 = vadd.f32 %v304, %v807
        %v946 = vadd.f32 %v305, %v809
        %v947 = vadd.f32 %v306, %v813
        %v948 = vadd.f32 %v307, %v815
        %v949 = vadd.f32 %v308, %v817
        %v950 = vadd.f32 %v309, %v819
        %v951 = vadd.f32 %v310, %v823
        %v952 = vadd.f32 %v311, %v825
        %v953 = vadd.f32 %v312, %v827
        %v954 = vadd.f32 %v313, %v829
        %v955 = vadd.f32 %v314, %v833
        %v956 = vadd.f32 %v315, %v835
        %v957 = vadd.f32 %v316, %v837
        %v958 = vadd.f32 %v317, %v839
        %v959 = vadd.f32 %v318, %v843
        %v960 = vadd.f32 %v319, %v845
        %v961 = vadd.f32 %v320, %v847
        %v962 = vadd.f32 %v321, %v849
        %v963 = vadd.f32 %v322, %v853
        %v964 = vadd.f32 %v323, %v855
        %v965 = vadd.f32 %v324, %v857
        %v966 = vadd.f32 %v325, %v859
        %v967 = vadd.f32 %v326, %v863
        %v968 = vadd.f32 %v327, %v865
        %v969 = vadd.f32 %v328, %v867
        %v970 = vadd.f32 %v329, %v869
        %v971 = vadd.f32 %v330, %v873
        %v972 = vadd.f32 %v331, %v875
        %v973 = vadd.f32 %v332, %v877
        %v974 = vadd.f32 %v333, %v879
        %v975 = vadd.f32 %v334, %v883
        %v976 = vadd.f32 %v335, %v885
        %v977 = vadd.f32 %v336, %v887
        %v978 = vadd.f32 %v337, %v889
        %v979 = vadd.f32 %v338, %v893
        %v980 = vadd.f32 %v339, %v895
        %v981 = vadd.f32 %v340, %v897
        %v982 = vadd.f32 %v341, %v899
        %v983 = vadd.f32 %v342, %v903
        %v984 = vadd.f32 %v343, %v905
        %v985 = vadd.f32 %v344, %v907
        %v986 = vadd.f32 %v345, %v909
        %v987 = vadd.f32 %v346, %v913
        %v988 = vadd.f32 %v347, %v915
        %v989 = vadd.f32 %v348, %v917
        %v990 = vadd.f32 %v349, %v919
        %v991 = vadd.f32 %v350, %v923
        %v992 = vadd.f32 %v351, %v925
        %v993 = vadd.f32 %v352, %v927
        %v994 = vadd.f32 %v353, %v929
        %995 = vst [vmem:[#allocation2] sm:$0xff] %v931
        %996 = vst [vmem:[#allocation2 + $0x8] sm:$0xff] %v932
        %997 = vst [vmem:[#allocation2 + $0x10] sm:$0xff] %v933
        %998 = vst [vmem:[#allocation2 + $0x18] sm:$0xff] %v934
        %999 = vst [vmem:[#allocation2 + $0x20] sm:$0xff] %v935
        %1000 = vst [vmem:[#allocation2 + $0x28] sm:$0xff] %v936
        %1001 = vst [vmem:[#allocation2 + $0x30] sm:$0xff] %v937
        %1002 = vst [vmem:[#allocation2 + $0x38] sm:$0xff] %v938
        %1003 = vst [vmem:[#allocation2 + $0x40] sm:$0xff] %v939
        %1004 = vst [vmem:[#allocation2 + $0x48] sm:$0xff] %v940
        %1005 = vst [vmem:[#allocation2 + $0x50] sm:$0xff] %v941
        %1006 = vst [vmem:[#allocation2 + $0x58] sm:$0xff] %v942
        %1007 = vst [vmem:[#allocation2 + $0x60] sm:$0xff] %v943
        %1008 = vst [vmem:[#allocation2 + $0x68] sm:$0xff] %v944
        %1009 = vst [vmem:[#allocation2 + $0x70] sm:$0xff] %v945
        %1010 = vst [vmem:[#allocation2 + $0x78] sm:$0xff] %v946
        %1011 = vst [vmem:[#allocation2 + $0x80] sm:$0xff] %v947
        %1012 = vst [vmem:[#allocation2 + $0x88] sm:$0xff] %v948
        %1013 = vst [vmem:[#allocation2 + $0x90] sm:$0xff] %v949
        %1014 = vst [vmem:[#allocation2 + $0x98] sm:$0xff] %v950
        %1015 = vst [vmem:[#allocation2 + $0xa0] sm:$0xff] %v951
        %1016 = vst [vmem:[#allocation2 + $0xa8] sm:$0xff] %v952
        %1017 = vst [vmem:[#allocation2 + $0xb0] sm:$0xff] %v953
        %1018 = vst [vmem:[#allocation2 + $0xb8] sm:$0xff] %v954
        %1019 = vst [vmem:[#allocation2 + $0xc0] sm:$0xff] %v955
        %1020 = vst [vmem:[#allocation2 + $0xc8] sm:$0xff] %v956
        %1021 = vst [vmem:[#allocation2 + $0xd0] sm:$0xff] %v957
        %1022 = vst [vmem:[#allocation2 + $0xd8] sm:$0xff] %v958
        %1023 = vst [vmem:[#allocation2 + $0xe0] sm:$0xff] %v959
        %1024 = vst [vmem:[#allocation2 + $0xe8] sm:$0xff] %v960
        %1025 = vst [vmem:[#allocation2 + $0xf0] sm:$0xff] %v961
        %1026 = vst [vmem:[#allocation2 + $0xf8] sm:$0xff] %v962
        %1027 = vst [vmem:[#allocation2 + $0x100] sm:$0xff] %v963
        %1028 = vst [vmem:[#allocation2 + $0x108] sm:$0xff] %v964
        %1029 = vst [vmem:[#allocation2 + $0x110] sm:$0xff] %v965
        %1030 = vst [vmem:[#allocation2 + $0x118] sm:$0xff] %v966
        %1031 = vst [vmem:[#allocation2 + $0x120] sm:$0xff] %v967
        %1032 = vst [vmem:[#allocation2 + $0x128] sm:$0xff] %v968
        %1033 = vst [vmem:[#allocation2 + $0x130] sm:$0xff] %v969
        %1034 = vst [vmem:[#allocation2 + $0x138] sm:$0xff] %v970
        %1035 = vst [vmem:[#allocation2 + $0x140] sm:$0xff] %v971
        %1036 = vst [vmem:[#allocation2 + $0x148] sm:$0xff] %v972
        %1037 = vst [vmem:[#allocation2 + $0x150] sm:$0xff] %v973
        %1038 = vst [vmem:[#allocation2 + $0x158] sm:$0xff] %v974
        %1039 = vst [vmem:[#allocation2 + $0x160] sm:$0xff] %v975
        %1040 = vst [vmem:[#allocation2 + $0x168] sm:$0xff] %v976
        %1041 = vst [vmem:[#allocation2 + $0x170] sm:$0xff] %v977
        %1042 = vst [vmem:[#allocation2 + $0x178] sm:$0xff] %v978
        %1043 = vst [vmem:[#allocation2 + $0x180] sm:$0xff] %v979
        %1044 = vst [vmem:[#allocation2 + $0x188] sm:$0xff] %v980
        %1045 = vst [vmem:[#allocation2 + $0x190] sm:$0xff] %v981
        %1046 = vst [vmem:[#allocation2 + $0x198] sm:$0xff] %v982
        %1047 = vst [vmem:[#allocation2 + $0x1a0] sm:$0xff] %v983
        %1048 = vst [vmem:[#allocation2 + $0x1a8] sm:$0xff] %v984
        %1049 = vst [vmem:[#allocation2 + $0x1b0] sm:$0xff] %v985
        %1050 = vst [vmem:[#allocation2 + $0x1b8] sm:$0xff] %v986
        %1051 = vst [vmem:[#allocation2 + $0x1c0] sm:$0xff] %v987
        %1052 = vst [vmem:[#allocation2 + $0x1c8] sm:$0xff] %v988
        %1053 = vst [vmem:[#allocation2 + $0x1d0] sm:$0xff] %v989
        %1054 = vst [vmem:[#allocation2 + $0x1d8] sm:$0xff] %v990
        %1055 = vst [vmem:[#allocation2 + $0x1e0] sm:$0xff] %v991
        %1056 = vst [vmem:[#allocation2 + $0x1e8] sm:$0xff] %v992
        %1057 = vst [vmem:[#allocation2 + $0x1f0] sm:$0xff] %v993
        %1058 = vst [vmem:[#allocation2 + $0x1f8] sm:$0xff] %v994
        // Predicated region
        $region41: #{tpu_custom_call.1} parent=27 // pred_check
          %p1059 = pneg %p222
        $region42: #{tpu_custom_call.1} parent=27 // pred_check_branch
          %1061 = sbr.rel (%p1059) target = $region44
        $region43: #{tpu_custom_call.1} parent=27 // pred_region
          %v1062 = vld [vmem:[#allocation2] sm:$0xff]
          %v1063 = vld [vmem:[#allocation2 + $0x8] sm:$0xff]
          %v1064 = vld [vmem:[#allocation2 + $0x10] sm:$0xff]
          %v1065 = vld [vmem:[#allocation2 + $0x18] sm:$0xff]
          %v1066 = vld [vmem:[#allocation2 + $0x20] sm:$0xff]
          %v1067 = vld [vmem:[#allocation2 + $0x28] sm:$0xff]
          %v1068 = vld [vmem:[#allocation2 + $0x30] sm:$0xff]
          %v1069 = vld [vmem:[#allocation2 + $0x38] sm:$0xff]
          %v1070 = vld [vmem:[#allocation2 + $0x40] sm:$0xff]
          %v1071 = vld [vmem:[#allocation2 + $0x48] sm:$0xff]
          %v1072 = vld [vmem:[#allocation2 + $0x50] sm:$0xff]
          %v1073 = vld [vmem:[#allocation2 + $0x58] sm:$0xff]
          %v1074 = vld [vmem:[#allocation2 + $0x60] sm:$0xff]
          %v1075 = vld [vmem:[#allocation2 + $0x68] sm:$0xff]
          %v1076 = vld [vmem:[#allocation2 + $0x70] sm:$0xff]
          %v1077 = vld [vmem:[#allocation2 + $0x78] sm:$0xff]
          %v1078 = vld [vmem:[#allocation2 + $0x80] sm:$0xff]
          %v1079 = vld [vmem:[#allocation2 + $0x88] sm:$0xff]
          %v1080 = vld [vmem:[#allocation2 + $0x90] sm:$0xff]
          %v1081 = vld [vmem:[#allocation2 + $0x98] sm:$0xff]
          %v1082 = vld [vmem:[#allocation2 + $0xa0] sm:$0xff]
          %v1083 = vld [vmem:[#allocation2 + $0xa8] sm:$0xff]
          %v1084 = vld [vmem:[#allocation2 + $0xb0] sm:$0xff]
          %v1085 = vld [vmem:[#allocation2 + $0xb8] sm:$0xff]
          %v1086 = vld [vmem:[#allocation2 + $0xc0] sm:$0xff]
          %v1087 = vld [vmem:[#allocation2 + $0xc8] sm:$0xff]
          %v1088 = vld [vmem:[#allocation2 + $0xd0] sm:$0xff]
          %v1089 = vld [vmem:[#allocation2 + $0xd8] sm:$0xff]
          %v1090 = vld [vmem:[#allocation2 + $0xe0] sm:$0xff]
          %v1091 = vld [vmem:[#allocation2 + $0xe8] sm:$0xff]
          %v1092 = vld [vmem:[#allocation2 + $0xf0] sm:$0xff]
          %v1093 = vld [vmem:[#allocation2 + $0xf8] sm:$0xff]
          %v1094 = vld [vmem:[#allocation2 + $0x100] sm:$0xff]
          %v1095 = vld [vmem:[#allocation2 + $0x108] sm:$0xff]
          %v1096 = vld [vmem:[#allocation2 + $0x110] sm:$0xff]
          %v1097 = vld [vmem:[#allocation2 + $0x118] sm:$0xff]
          %v1098 = vld [vmem:[#allocation2 + $0x120] sm:$0xff]
          %v1099 = vld [vmem:[#allocation2 + $0x128] sm:$0xff]
          %v1100 = vld [vmem:[#allocation2 + $0x130] sm:$0xff]
          %v1101 = vld [vmem:[#allocation2 + $0x138] sm:$0xff]
          %v1102 = vld [vmem:[#allocation2 + $0x140] sm:$0xff]
          %v1103 = vld [vmem:[#allocation2 + $0x148] sm:$0xff]
          %v1104 = vld [vmem:[#allocation2 + $0x150] sm:$0xff]
          %v1105 = vld [vmem:[#allocation2 + $0x158] sm:$0xff]
          %v1106 = vld [vmem:[#allocation2 + $0x160] sm:$0xff]
          %v1107 = vld [vmem:[#allocation2 + $0x168] sm:$0xff]
          %v1108 = vld [vmem:[#allocation2 + $0x170] sm:$0xff]
          %v1109 = vld [vmem:[#allocation2 + $0x178] sm:$0xff]
          %v1110 = vld [vmem:[#allocation2 + $0x180] sm:$0xff]
          %v1111 = vld [vmem:[#allocation2 + $0x188] sm:$0xff]
          %v1112 = vld [vmem:[#allocation2 + $0x190] sm:$0xff]
          %v1113 = vld [vmem:[#allocation2 + $0x198] sm:$0xff]
          %v1114 = vld [vmem:[#allocation2 + $0x1a0] sm:$0xff]
          %v1115 = vld [vmem:[#allocation2 + $0x1a8] sm:$0xff]
          %v1116 = vld [vmem:[#allocation2 + $0x1b0] sm:$0xff]
          %v1117 = vld [vmem:[#allocation2 + $0x1b8] sm:$0xff]
          %v1118 = vld [vmem:[#allocation2 + $0x1c0] sm:$0xff]
          %v1119 = vld [vmem:[#allocation2 + $0x1c8] sm:$0xff]
          %v1120 = vld [vmem:[#allocation2 + $0x1d0] sm:$0xff]
          %v1121 = vld [vmem:[#allocation2 + $0x1d8] sm:$0xff]
          %v1122 = vld [vmem:[#allocation2 + $0x1e0] sm:$0xff]
          %v1123 = vld [vmem:[#allocation2 + $0x1e8] sm:$0xff]
          %v1124 = vld [vmem:[#allocation2 + $0x1f0] sm:$0xff]
          %v1125 = vld [vmem:[#allocation2 + $0x1f8] sm:$0xff]
          %v1126 = vpack.c.bf16 %v1064, %v1062
          %v1127 = vpack.c.bf16 %v1065, %v1063
          %v1128 = vpack.c.bf16 %v1068, %v1066
          %v1129 = vpack.c.bf16 %v1069, %v1067
          %v1130 = vpack.c.bf16 %v1072, %v1070
          %v1131 = vpack.c.bf16 %v1073, %v1071
          %v1132 = vpack.c.bf16 %v1076, %v1074
          %v1133 = vpack.c.bf16 %v1077, %v1075
          %v1134 = vpack.c.bf16 %v1080, %v1078
          %v1135 = vpack.c.bf16 %v1081, %v1079
          %v1136 = vpack.c.bf16 %v1084, %v1082
          %v1137 = vpack.c.bf16 %v1085, %v1083
          %v1138 = vpack.c.bf16 %v1088, %v1086
          %v1139 = vpack.c.bf16 %v1089, %v1087
          %v1140 = vpack.c.bf16 %v1092, %v1090
          %v1141 = vpack.c.bf16 %v1093, %v1091
          %v1142 = vpack.c.bf16 %v1096, %v1094
          %v1143 = vpack.c.bf16 %v1097, %v1095
          %v1144 = vpack.c.bf16 %v1100, %v1098
          %v1145 = vpack.c.bf16 %v1101, %v1099
          %v1146 = vpack.c.bf16 %v1104, %v1102
          %v1147 = vpack.c.bf16 %v1105, %v1103
          %v1148 = vpack.c.bf16 %v1108, %v1106
          %v1149 = vpack.c.bf16 %v1109, %v1107
          %v1150 = vpack.c.bf16 %v1112, %v1110
          %v1151 = vpack.c.bf16 %v1113, %v1111
          %v1152 = vpack.c.bf16 %v1116, %v1114
          %v1153 = vpack.c.bf16 %v1117, %v1115
          %v1154 = vpack.c.bf16 %v1120, %v1118
          %v1155 = vpack.c.bf16 %v1121, %v1119
          %v1156 = vpack.c.bf16 %v1124, %v1122
          %v1157 = vpack.c.bf16 %v1125, %v1123
          %v1190 = vunpack.c.l.b16 %v1126
          %v1191 = vunpack.c.l.b16 %v1127
          %v1192 = vunpack.c.h.b16 %v1126
          %v1193 = vunpack.c.h.b16 %v1127
          %v1194 = vunpack.c.l.b16 %v1128
          %v1195 = vunpack.c.l.b16 %v1129
          %v1196 = vunpack.c.h.b16 %v1128
          %v1197 = vunpack.c.h.b16 %v1129
          %v1198 = vunpack.c.l.b16 %v1130
          %v1199 = vunpack.c.l.b16 %v1131
          %v1200 = vunpack.c.h.b16 %v1130
          %v1201 = vunpack.c.h.b16 %v1131
          %v1202 = vunpack.c.l.b16 %v1132
          %v1203 = vunpack.c.l.b16 %v1133
          %v1204 = vunpack.c.h.b16 %v1132
          %v1205 = vunpack.c.h.b16 %v1133
          %v1206 = vunpack.c.l.b16 %v1134
          %v1207 = vunpack.c.l.b16 %v1135
          %v1208 = vunpack.c.h.b16 %v1134
          %v1209 = vunpack.c.h.b16 %v1135
          %v1210 = vunpack.c.l.b16 %v1136
          %v1211 = vunpack.c.l.b16 %v1137
          %v1212 = vunpack.c.h.b16 %v1136
          %v1213 = vunpack.c.h.b16 %v1137
          %v1214 = vunpack.c.l.b16 %v1138
          %v1215 = vunpack.c.l.b16 %v1139
          %v1216 = vunpack.c.h.b16 %v1138
          %v1217 = vunpack.c.h.b16 %v1139
          %v1218 = vunpack.c.l.b16 %v1140
          %v1219 = vunpack.c.l.b16 %v1141
          %v1220 = vunpack.c.h.b16 %v1140
          %v1221 = vunpack.c.h.b16 %v1141
          %v1222 = vunpack.c.l.b16 %v1142
          %v1223 = vunpack.c.l.b16 %v1143
          %v1224 = vunpack.c.h.b16 %v1142
          %v1225 = vunpack.c.h.b16 %v1143
          %v1226 = vunpack.c.l.b16 %v1144
          %v1227 = vunpack.c.l.b16 %v1145
          %v1228 = vunpack.c.h.b16 %v1144
          %v1229 = vunpack.c.h.b16 %v1145
          %v1230 = vunpack.c.l.b16 %v1146
          %v1231 = vunpack.c.l.b16 %v1147
          %v1232 = vunpack.c.h.b16 %v1146
          %v1233 = vunpack.c.h.b16 %v1147
          %v1234 = vunpack.c.l.b16 %v1148
          %v1235 = vunpack.c.l.b16 %v1149
          %v1236 = vunpack.c.h.b16 %v1148
          %v1237 = vunpack.c.h.b16 %v1149
          %v1238 = vunpack.c.l.b16 %v1150
          %v1239 = vunpack.c.l.b16 %v1151
          %v1240 = vunpack.c.h.b16 %v1150
          %v1241 = vunpack.c.h.b16 %v1151
          %v1242 = vunpack.c.l.b16 %v1152
          %v1243 = vunpack.c.l.b16 %v1153
          %v1244 = vunpack.c.h.b16 %v1152
          %v1245 = vunpack.c.h.b16 %v1153
          %v1246 = vunpack.c.l.b16 %v1154
          %v1247 = vunpack.c.l.b16 %v1155
          %v1248 = vunpack.c.h.b16 %v1154
          %v1249 = vunpack.c.h.b16 %v1155
          %v1250 = vunpack.c.l.b16 %v1156
          %v1251 = vunpack.c.l.b16 %v1157
          %v1252 = vunpack.c.h.b16 %v1156
          %v1253 = vunpack.c.h.b16 %v1157
          %v1254 = vpack.c.b16 %v1191, %v1190
          %v1255 = vpack.c.b16 %v1193, %v1192
          %v1256 = vpack.c.b16 %v1195, %v1194
          %v1257 = vpack.c.b16 %v1197, %v1196
          %v1258 = vpack.c.b16 %v1199, %v1198
          %v1259 = vpack.c.b16 %v1201, %v1200
          %v1260 = vpack.c.b16 %v1203, %v1202
          %v1261 = vpack.c.b16 %v1205, %v1204
          %v1262 = vpack.c.b16 %v1207, %v1206
          %v1263 = vpack.c.b16 %v1209, %v1208
          %v1264 = vpack.c.b16 %v1211, %v1210
          %v1265 = vpack.c.b16 %v1213, %v1212
          %v1266 = vpack.c.b16 %v1215, %v1214
          %v1267 = vpack.c.b16 %v1217, %v1216
          %v1268 = vpack.c.b16 %v1219, %v1218
          %v1269 = vpack.c.b16 %v1221, %v1220
          %v1270 = vpack.c.b16 %v1223, %v1222
          %v1271 = vpack.c.b16 %v1225, %v1224
          %v1272 = vpack.c.b16 %v1227, %v1226
          %v1273 = vpack.c.b16 %v1229, %v1228
          %v1274 = vpack.c.b16 %v1231, %v1230
          %v1275 = vpack.c.b16 %v1233, %v1232
          %v1276 = vpack.c.b16 %v1235, %v1234
          %v1277 = vpack.c.b16 %v1237, %v1236
          %v1278 = vpack.c.b16 %v1239, %v1238
          %v1279 = vpack.c.b16 %v1241, %v1240
          %v1280 = vpack.c.b16 %v1243, %v1242
          %v1281 = vpack.c.b16 %v1245, %v1244
          %v1282 = vpack.c.b16 %v1247, %v1246
          %v1283 = vpack.c.b16 %v1249, %v1248
          %v1284 = vpack.c.b16 %v1251, %v1250
          %v1285 = vpack.c.b16 %v1253, %v1252
          %1318 = vst [vmem:[%s215] sm:$0xff] %v1254
          %1319 = vst [vmem:[%s215 + $0x8] sm:$0xff] %v1255
          %1320 = vst [vmem:[%s215 + $0x10] sm:$0xff] %v1256
          %1321 = vst [vmem:[%s215 + $0x18] sm:$0xff] %v1257
          %1322 = vst [vmem:[%s215 + $0x20] sm:$0xff] %v1258
          %1323 = vst [vmem:[%s215 + $0x28] sm:$0xff] %v1259
          %1324 = vst [vmem:[%s215 + $0x30] sm:$0xff] %v1260
          %1325 = vst [vmem:[%s215 + $0x38] sm:$0xff] %v1261
          %1326 = vst [vmem:[%s215 + $0x40] sm:$0xff] %v1262
          %1327 = vst [vmem:[%s215 + $0x48] sm:$0xff] %v1263
          %1328 = vst [vmem:[%s215 + $0x50] sm:$0xff] %v1264
          %1329 = vst [vmem:[%s215 + $0x58] sm:$0xff] %v1265
          %1330 = vst [vmem:[%s215 + $0x60] sm:$0xff] %v1266
          %1331 = vst [vmem:[%s215 + $0x68] sm:$0xff] %v1267
          %1332 = vst [vmem:[%s215 + $0x70] sm:$0xff] %v1268
          %1333 = vst [vmem:[%s215 + $0x78] sm:$0xff] %v1269
          %1334 = vst [vmem:[%s215 + $0x80] sm:$0xff] %v1270
          %1335 = vst [vmem:[%s215 + $0x88] sm:$0xff] %v1271
          %1336 = vst [vmem:[%s215 + $0x90] sm:$0xff] %v1272
          %1337 = vst [vmem:[%s215 + $0x98] sm:$0xff] %v1273
          %1338 = vst [vmem:[%s215 + $0xa0] sm:$0xff] %v1274
          %1339 = vst [vmem:[%s215 + $0xa8] sm:$0xff] %v1275
          %1340 = vst [vmem:[%s215 + $0xb0] sm:$0xff] %v1276
          %1341 = vst [vmem:[%s215 + $0xb8] sm:$0xff] %v1277
          %1342 = vst [vmem:[%s215 + $0xc0] sm:$0xff] %v1278
          %1343 = vst [vmem:[%s215 + $0xc8] sm:$0xff] %v1279
          %1344 = vst [vmem:[%s215 + $0xd0] sm:$0xff] %v1280
          %1345 = vst [vmem:[%s215 + $0xd8] sm:$0xff] %v1281
          %1346 = vst [vmem:[%s215 + $0xe0] sm:$0xff] %v1282
          %1347 = vst [vmem:[%s215 + $0xe8] sm:$0xff] %v1283
          %1348 = vst [vmem:[%s215 + $0xf0] sm:$0xff] %v1284
          %1349 = vst [vmem:[%s215 + $0xf8] sm:$0xff] %v1285
        $region44: #{tpu_custom_call.1} parent=27 // pred_fallthru
          _
        %s1350 = sand.u32 %s105, 1
        %s1351 = scalar_lea.sflag [#allocation5], %s1350
        %s1352 = sand.u32 %s105, 1
        %s1353 = smul.addr %s1352, 256
        %s1354 = scalar_lea.vmem [#allocation8], %s1353
        // Predicated region
        $region45: #{tpu_custom_call.1} parent=27 // pred_check
          %p1355 = pneg %p115
        $region46: #{tpu_custom_call.1} parent=27 // pred_check_branch
          %1357 = sbr.rel (%p1355) target = $region48
        $region47: #{tpu_custom_call.1} parent=27 // pred_region
          %s1358 = smul.u32 32, %s25
          %s1359 = smul.u32 2, %s26
          %s1361 = ssub.s32 4096, 4096
          %1362 = vsyncadd %s1351, %s1361
          %s1363 = smul.addr %s1358, 8
          %s1364 = sadd.s32 %s1359, %s1363
          %s1365 = smul.addr %s1364, 64
          %s1366 = scalar_lea.hbm %s2, %s1365
          %s1367 = sshll.u32 %s1354, 4
          %s1368 = int_to_ptr.vmem [resolvable:$true] %s1367
          %1373 = dma.vmem_to_hbm [thread:$0]  %s1368, 4096, %s1366, %s1351, 128, 512, 8
        $region48: #{tpu_custom_call.1} parent=27 // pred_fallthru
          _
      $region28: #{tpu_custom_call.1} parent=5 // pred_fallthru
        _
      %p1374 = scmp.le.s32.totalorder 2, %s15
      // Predicated region
      $region49: #{tpu_custom_call.1} parent=5 // pred_check
        %p1375 = pneg %p1374
      $region50: #{tpu_custom_call.1} parent=5 // pred_check_branch
        %1377 = sbr.rel (%p1375) target = $region52
      $region51: #{tpu_custom_call.1} parent=5 // pred_region
        %s1378 = ssub.s32 %s15, 2
        // Predicated region
        $region53: #{tpu_custom_call.1} parent=51 // pred_check
          %p1379 = pneg %p121
        $region54: #{tpu_custom_call.1} parent=51 // pred_check_branch
          %1381 = sbr.rel (%p1379) target = $region56
        $region55: #{tpu_custom_call.1} parent=51 // pred_region
          %s1382 = sand.u32 %s106, 1
          %s1383 = scalar_lea.sflag [#allocation5], %s1382
          %s1384 = sand.u32 %s106, 1
          %s1385 = smul.addr %s1384, 256
          %s1386 = scalar_lea.vmem [#allocation8], %s1385
          %1387 = dma.done %s1383, 4096
        $region56: #{tpu_custom_call.1} parent=51 // pred_fallthru
          _
      $region52: #{tpu_custom_call.1} parent=5 // pred_fallthru
        _
    $region6: #{tpu_custom_call.1} parent=1 // loop_footer
      %s19 = sadd.s32 1, %s15
    $region7: #{tpu_custom_call.1} parent=1 // loop_footer_branch
      %14 = sbr.rel target = $region3
    $region8: #{tpu_custom_call.1} parent=1 // loop_exit
      _
    %1388 = vsyncpa [#allocation4], 1
    %s1389 = scalar_lea.sflag [#allocation4], 1
    %1390 = vsyncpa %s1389, 1
    %1391 = vsyncpa [#allocation7], 1
    %s1392 = scalar_lea.sflag [#allocation7], 1
    %1393 = vsyncpa %s1392, 1
    %1394 = vsyncpa [#allocation5], 1
    %s1395 = scalar_lea.sflag [#allocation5], 1
    %1396 = vsyncpa %s1395, 1

</llo_original>
